<compile_context>
chip_gen: v7x
topology: tpu7x:2x2x1
jax: 0.10.0
libtpu: 0.0.40
codegen_flags: <defaults>
</compile_context>

<pallas_src>
import numpy as np
import jax
import jax.numpy as jnp
from jax.experimental import pallas as pl
from jax.experimental.pallas import tpu as pltpu

# ----- synthetic model config -----
PATCH = 8          # encoder.patch_size
IN_CH = 3
D_MODEL = 32
N_HEADS = 2
D_HEAD = D_MODEL // N_HEADS
D_MLP = 64
N_CLS = 4
LN_EPS = 1e-6
DISTILLED = 0      # encoder.distilled  ->  num_extra_tokens = 1


# ---------------- fused Pallas kernel ----------------
def _segmenter_fused_kernel(
        patches_ref, cls_ref, pos_ref,
        patch_w_ref, patch_b_ref,
        ln1_g_ref, ln1_b_ref,
        qkv_w_ref, qkv_b_ref,
        proj_w_ref, proj_b_ref,
        ln2_g_ref, ln2_b_ref,
        fc1_w_ref, fc1_b_ref,
        fc2_w_ref, fc2_b_ref,
        lnf_g_ref, lnf_b_ref,
        head_wt_ref, head_b_ref, up_ref,
        out_ref,
        x_scr, attn_scr):
    """One batch element per grid step.  Everything lives in VMEM/vregs."""

    def layernorm(x, g_ref, b_ref):
        mu = jnp.mean(x, axis=-1, keepdims=True)
        xc = x - mu
        var = jnp.mean(xc * xc, axis=-1, keepdims=True)
        return xc * jax.lax.rsqrt(var + LN_EPS) * g_ref[...] + b_ref[...]

    def linear(x, w_ref, b_ref):
        # bf16 MXU inputs, f32 accumulate (native on v6e/v7x, fine on v5e MXU)
        y = jnp.dot(x.astype(w_ref.dtype), w_ref[...],
                    preferred_element_type=jnp.float32)
        return y + b_ref[...]

    # ---- patch embedding: Conv2d(k=s=PATCH) as a single matmul ----
    patches = patches_ref[0]                                   # (N, C*P*P)
    tok = linear(patches, patch_w_ref, patch_b_ref)            # (N, D)

    # ---- prepend cls token, add positional embedding ----
    x_scr[0:1, :] = cls_ref[...]
    x_scr[1:, :] = tok
    x = x_scr[...] + pos_ref[...]                              # (T, D)

    # ---- one pre-norm transformer block ----
    xn = layernorm(x, ln1_g_ref, ln1_b_ref)
    qkv = linear(xn, qkv_w_ref, qkv_b_ref)                     # (T, 3D)
    scale = D_HEAD ** -0.5
    for h in range(N_HEADS):                                   # unrolled (2)
        qh = qkv[:, h * D_HEAD:(h + 1) * D_HEAD]
        kh = qkv[:, D_MODEL + h * D_HEAD:D_MODEL + (h + 1) * D_HEAD]
        vh = qkv[:, 2 * D_MODEL + h * D_HEAD:2 * D_MODEL + (h + 1) * D_HEAD]
        s = jax.lax.dot_general(                               # q @ k.T
            qh.astype(jnp.bfloat16), kh.astype(jnp.bfloat16),
            (((1,), (1,)), ((), ())),
            preferred_element_type=jnp.float32) * scale        # (T, T) f32
        s = s - jnp.max(s, axis=-1, keepdims=True)
        p = jnp.exp(s)
        p = p * pl.reciprocal(jnp.sum(p, axis=-1, keepdims=True), approx=True)
        attn_scr[:, h * D_HEAD:(h + 1) * D_HEAD] = jnp.dot(
            p.astype(jnp.bfloat16), vh.astype(jnp.bfloat16),
            preferred_element_type=jnp.float32)
    x = x + linear(attn_scr[...], proj_w_ref, proj_b_ref)

    xn = layernorm(x, ln2_g_ref, ln2_b_ref)
    # TODO(synk): erf-exact GELU (timm default) left as tanh approx for guaranteed Mosaic lowering.
    hmid = jax.nn.gelu(linear(xn, fc1_w_ref, fc1_b_ref), approximate=True)
    x = x + linear(hmid, fc2_w_ref, fc2_b_ref)

    # ---- final encoder norm; drop extra (cls) tokens ----
    x = layernorm(x, lnf_g_ref, lnf_b_ref)
    feats = x[1 + DISTILLED:, :]                               # (N, D)

    # ---- DecoderLinear head, kept transposed:  (n_cls, N) ----
    logits_t = jax.lax.dot_general(                            # head_w.T @ feats.T
        head_wt_ref[...], feats, (((1,), (1,)), ((), ())),
        preferred_element_type=jnp.float32) + head_b_ref[...]

    # ---- F.interpolate(bilinear) fused as one matmul: (n_cls, N)@(N, H*W) ----
    out_ref[0] = jnp.dot(logits_t, up_ref[...],
                         preferred_element_type=jnp.float32)   # lane-dense store


# ---------------- helpers ----------------
def _bilinear_matrix(out_size, in_size):
    """1-D resampling matrix matching F.interpolate(mode='bilinear',
    align_corners=False); built at trace time with numpy."""
    i = np.arange(out_size, dtype=np.float64)
    src = (i + 0.5) * (in_size / out_size) - 0.5
    src = np.maximum(src, 0.0)
    i0 = np.minimum(np.floor(src).astype(np.int64), in_size - 1)
    i1 = np.minimum(i0 + 1, in_size - 1)
    frac = src - i0
    W = np.zeros((out_size, in_size), dtype=np.float32)
    np.add.at(W, (np.arange(out_size), i0), (1.0 - frac).astype(np.float32))
    np.add.at(W, (np.arange(out_size), i1), frac.astype(np.float32))
    return W


def init_params(key, num_patches):
    ks = jax.random.split(key, 8)

    def nrm(k, shape, scale=0.02):
        return (scale * jax.random.normal(k, shape)).astype(jnp.float32)

    D = D_MODEL
    return {
        # patch embedding = Conv2d(IN_CH, D, kernel=stride=PATCH) as a matmul;
        # weight stored pre-flattened as [C*P*P, D]
        'patch_w': nrm(ks[0], (IN_CH * PATCH * PATCH, D)),
        'patch_b': jnp.zeros((1, D), jnp.float32),
        'cls_token': nrm(ks[1], (1, D)),
        'pos_embed': nrm(ks[2], (1 + num_patches, D)),
        'ln1_g': jnp.ones((1, D), jnp.float32),
        'ln1_b': jnp.zeros((1, D), jnp.float32),
        'qkv_w': nrm(ks[3], (D, 3 * D)),
        'qkv_b': jnp.zeros((1, 3 * D), jnp.float32),
        'proj_w': nrm(ks[4], (D, D)),
        'proj_b': jnp.zeros((1, D), jnp.float32),
        'ln2_g': jnp.ones((1, D), jnp.float32),
        'ln2_b': jnp.zeros((1, D), jnp.float32),
        'fc1_w': nrm(ks[5], (D, D_MLP)),
        'fc1_b': jnp.zeros((1, D_MLP), jnp.float32),
        'fc2_w': nrm(ks[6], (D_MLP, D)),
        'fc2_b': jnp.zeros((1, D), jnp.float32),
        'lnf_g': jnp.ones((1, D), jnp.float32),
        'lnf_b': jnp.zeros((1, D), jnp.float32),
        # DecoderLinear head
        'head_w': nrm(ks[7], (D, N_CLS)),
        'head_b': jnp.zeros((N_CLS, 1), jnp.float32),
    }


# ---------------- model forward ----------------
def segmenter_forward(im, params):
    """Segmenter.forward: pad -> encoder -> drop extra tokens -> decoder
    -> bilinear upsample -> unpad.  One fused pallas_call over grid=(B,)."""
    B, C, H_ori, W_ori = im.shape
    pad_h = (-H_ori) % PATCH
    pad_w = (-W_ori) % PATCH
    im_p = jnp.pad(im, ((0, 0), (0, 0), (0, pad_h), (0, pad_w)))   # padding()
    H, W = H_ori + pad_h, W_ori + pad_w
    gh, gw = H // PATCH, W // PATCH
    N = gh * gw
    T = 1 + DISTILLED + N
    S = H * W
    CPP = C * PATCH * PATCH

    # Conv2d(stride=kernel=PATCH) patch extraction (channel-major patch order)
    patches = im_p.reshape(B, C, gh, PATCH, gw, PATCH)
    patches = patches.transpose(0, 2, 4, 1, 3, 5).reshape(B, N, CPP)

    # Fused separable bilinear matrix: up[N, H*W] = kron(Rh, Rw).T
    up = jnp.asarray(
        np.kron(_bilinear_matrix(H, gh), _bilinear_matrix(W, gw)).T)

    bf16 = jnp.bfloat16
    p = params
    shared = [
        p['cls_token'], p['pos_embed'],
        p['patch_w'].astype(bf16), p['patch_b'],
        p['ln1_g'], p['ln1_b'],
        p['qkv_w'].astype(bf16), p['qkv_b'],
        p['proj_w'].astype(bf16), p['proj_b'],
        p['ln2_g'], p['ln2_b'],
        p['fc1_w'].astype(bf16), p['fc1_b'],
        p['fc2_w'].astype(bf16), p['fc2_b'],
        p['lnf_g'], p['lnf_b'],
        p['head_w'].T, p['head_b'], up,
    ]

    def shared_spec(a):                     # full-array block, shared over batch
        return pl.BlockSpec(a.shape, lambda b: (0, 0))

    out = pl.pallas_call(
        _segmenter_fused_kernel,
        out_shape=jax.ShapeDtypeStruct((B, N_CLS, S), jnp.float32),
        grid=(B,),
        in_specs=[pl.BlockSpec((1, N, CPP), lambda b: (b, 0, 0))]
                 + [shared_spec(a) for a in shared],
        out_specs=pl.BlockSpec((1, N_CLS, S), lambda b: (b, 0, 0)),
        scratch_shapes=[pltpu.VMEM((T, D_MODEL), jnp.float32),   # token slab
                        pltpu.VMEM((T, D_MODEL), jnp.float32)],  # attn heads
        compiler_params=pltpu.CompilerParams(
            dimension_semantics=("parallel",)),                  # v7x: 2 TCs
    )(patches, *shared)

    masks = out.reshape(B, N_CLS, H, W)
    return masks[:, :, :H_ori, :W_ori]                           # unpadding()


if __name__ == "__main__":
    B, H_ORI, W_ORI = 2, 14, 14                  # not a multiple of PATCH
    im = jax.random.normal(jax.random.PRNGKey(0),
                           (B, IN_CH, H_ORI, W_ORI), dtype=jnp.float32)

    H_pad = ((H_ORI + PATCH - 1) // PATCH) * PATCH
    W_pad = ((W_ORI + PATCH - 1) // PATCH) * PATCH
    num_patches = (H_pad // PATCH) * (W_pad // PATCH)
    params = init_params(jax.random.PRNGKey(42), num_patches)

    masks = jax.jit(segmenter_forward)(im, params)
    masks = jax.block_until_ready(masks)
    assert masks.shape == (B, N_CLS, H_ORI, W_ORI), masks.shape
    assert masks.dtype == jnp.float32
    print("KERNEL_OK")
</pallas_src>

<mosaic_0001>
module attributes {stable_mosaic.version = 11 : i64} {
  func.func @_segmenter_fused_kernel(%arg0: i32, %arg1: memref<1x4x192xf32, #tpu.memory_space<vmem>>, %arg2: memref<1x32xf32, #tpu.memory_space<vmem>>, %arg3: memref<5x32xf32, #tpu.memory_space<vmem>>, %arg4: memref<192x32xbf16, #tpu.memory_space<vmem>>, %arg5: memref<1x32xf32, #tpu.memory_space<vmem>>, %arg6: memref<1x32xf32, #tpu.memory_space<vmem>>, %arg7: memref<1x32xf32, #tpu.memory_space<vmem>>, %arg8: memref<32x96xbf16, #tpu.memory_space<vmem>>, %arg9: memref<1x96xf32, #tpu.memory_space<vmem>>, %arg10: memref<32x32xbf16, #tpu.memory_space<vmem>>, %arg11: memref<1x32xf32, #tpu.memory_space<vmem>>, %arg12: memref<1x32xf32, #tpu.memory_space<vmem>>, %arg13: memref<1x32xf32, #tpu.memory_space<vmem>>, %arg14: memref<32x64xbf16, #tpu.memory_space<vmem>>, %arg15: memref<1x64xf32, #tpu.memory_space<vmem>>, %arg16: memref<64x32xbf16, #tpu.memory_space<vmem>>, %arg17: memref<1x32xf32, #tpu.memory_space<vmem>>, %arg18: memref<1x32xf32, #tpu.memory_space<vmem>>, %arg19: memref<1x32xf32, #tpu.memory_space<vmem>>, %arg20: memref<4x32xf32, #tpu.memory_space<vmem>>, %arg21: memref<4x1xf32, #tpu.memory_space<vmem>>, %arg22: memref<4x256xf32, #tpu.memory_space<vmem>>, %arg23: memref<1x4x256xf32, #tpu.memory_space<vmem>>, %arg24: memref<5x32xf32, #tpu.memory_space<vmem>>, %arg25: memref<5x32xf32, #tpu.memory_space<vmem>>) attributes {dimension_semantics = [#tpu.dimension_semantics<parallel>], iteration_bounds = array<i64: 2>, scalar_prefetch = 0 : i64, scratch_operands = 2 : i64, tpu.core_type = #tpu.core_type<tc>, window_params = [{transform_indices = @transform_0, window_bounds = array<i64: 1, 4, 192>}, {pipeline_mode = #tpu.pipeline_mode<synchronous>, transform_indices = @transform_1, window_bounds = array<i64: 1, 32>}, {pipeline_mode = #tpu.pipeline_mode<synchronous>, transform_indices = @transform_2, window_bounds = array<i64: 5, 32>}, {pipeline_mode = #tpu.pipeline_mode<synchronous>, transform_indices = @transform_3, window_bounds = array<i64: 192, 32>}, {pipeline_mode = #tpu.pipeline_mode<synchronous>, transform_indices = @transform_4, window_bounds = array<i64: 1, 32>}, {pipeline_mode = #tpu.pipeline_mode<synchronous>, transform_indices = @transform_5, window_bounds = array<i64: 1, 32>}, {pipeline_mode = #tpu.pipeline_mode<synchronous>, transform_indices = @transform_6, window_bounds = array<i64: 1, 32>}, {pipeline_mode = #tpu.pipeline_mode<synchronous>, transform_indices = @transform_7, window_bounds = array<i64: 32, 96>}, {pipeline_mode = #tpu.pipeline_mode<synchronous>, transform_indices = @transform_8, window_bounds = array<i64: 1, 96>}, {pipeline_mode = #tpu.pipeline_mode<synchronous>, transform_indices = @transform_9, window_bounds = array<i64: 32, 32>}, {pipeline_mode = #tpu.pipeline_mode<synchronous>, transform_indices = @transform_10, window_bounds = array<i64: 1, 32>}, {pipeline_mode = #tpu.pipeline_mode<synchronous>, transform_indices = @transform_11, window_bounds = array<i64: 1, 32>}, {pipeline_mode = #tpu.pipeline_mode<synchronous>, transform_indices = @transform_12, window_bounds = array<i64: 1, 32>}, {pipeline_mode = #tpu.pipeline_mode<synchronous>, transform_indices = @transform_13, window_bounds = array<i64: 32, 64>}, {pipeline_mode = #tpu.pipeline_mode<synchronous>, transform_indices = @transform_14, window_bounds = array<i64: 1, 64>}, {pipeline_mode = #tpu.pipeline_mode<synchronous>, transform_indices = @transform_15, window_bounds = array<i64: 64, 32>}, {pipeline_mode = #tpu.pipeline_mode<synchronous>, transform_indices = @transform_16, window_bounds = array<i64: 1, 32>}, {pipeline_mode = #tpu.pipeline_mode<synchronous>, transform_indices = @transform_17, window_bounds = array<i64: 1, 32>}, {pipeline_mode = #tpu.pipeline_mode<synchronous>, transform_indices = @transform_18, window_bounds = array<i64: 1, 32>}, {pipeline_mode = #tpu.pipeline_mode<synchronous>, transform_indices = @transform_19, window_bounds = array<i64: 4, 32>}, {pipeline_mode = #tpu.pipeline_mode<synchronous>, transform_indices = @transform_20, window_bounds = array<i64: 4, 1>}, {pipeline_mode = #tpu.pipeline_mode<synchronous>, transform_indices = @transform_21, window_bounds = array<i64: 4, 256>}, {transform_indices = @transform_22, window_bounds = array<i64: 1, 4, 256>}]} {
    %c0 = arith.constant 0 : index
    %c0_0 = arith.constant 0 : index
    %c0_1 = arith.constant 0 : index
    %0 = vector.load %arg1[%c0, %c0_0, %c0_1] : memref<1x4x192xf32, #tpu.memory_space<vmem>>, vector<1x4x192xf32>
    %1 = vector.shape_cast %0 : vector<1x4x192xf32> to vector<4x192xf32>
    %2 = arith.truncf %1 : vector<4x192xf32> to vector<4x192xbf16>
    %c0_2 = arith.constant 0 : index
    %c0_3 = arith.constant 0 : index
    %3 = vector.load %arg4[%c0_2, %c0_3] : memref<192x32xbf16, #tpu.memory_space<vmem>>, vector<192x32xbf16>
    %cst = arith.constant dense<0.000000e+00> : vector<4x32xf32>
    %4 = tpu.matmul %2, %3, %cst {dimension_numbers = #tpu.dot_dimension_numbers<[1], [0], [0], [1], [0, 0, 1, 1], [], []>} : vector<4x192xbf16>, vector<192x32xbf16>, vector<4x32xf32> -> vector<4x32xf32>
    %c0_4 = arith.constant 0 : index
    %c0_5 = arith.constant 0 : index
    %5 = vector.load %arg5[%c0_4, %c0_5] : memref<1x32xf32, #tpu.memory_space<vmem>>, vector<1x32xf32>
    %6 = vector.broadcast %5 : vector<1x32xf32> to vector<4x32xf32>
    %7 = arith.addf %4, %6 : vector<4x32xf32>
    %c0_6 = arith.constant 0 : index
    %c0_7 = arith.constant 0 : index
    %8 = vector.load %arg2[%c0_6, %c0_7] : memref<1x32xf32, #tpu.memory_space<vmem>>, vector<1x32xf32>
    %c0_8 = arith.constant 0 : index
    %c0_9 = arith.constant 0 : index
    %9 = vector.load %arg24[%c0_8, %c0_9] : memref<5x32xf32, #tpu.memory_space<vmem>>, vector<1x32xf32>
    tpu.vector_store %arg24[%c0_8, %c0_9], %8 {strides = array<i32>} : memref<5x32xf32, #tpu.memory_space<vmem>>, vector<1x32xf32>,
    %c1 = arith.constant 1 : index
    %c0_10 = arith.constant 0 : index
    %10 = vector.load %arg24[%c1, %c0_10] : memref<5x32xf32, #tpu.memory_space<vmem>>, vector<4x32xf32>
    tpu.vector_store %arg24[%c1, %c0_10], %7 {strides = array<i32>} : memref<5x32xf32, #tpu.memory_space<vmem>>, vector<4x32xf32>,
    %c0_11 = arith.constant 0 : index
    %c0_12 = arith.constant 0 : index
    %11 = vector.load %arg24[%c0_11, %c0_12] : memref<5x32xf32, #tpu.memory_space<vmem>>, vector<5x32xf32>
    %c0_13 = arith.constant 0 : index
    %c0_14 = arith.constant 0 : index
    %12 = vector.load %arg3[%c0_13, %c0_14] : memref<5x32xf32, #tpu.memory_space<vmem>>, vector<5x32xf32>
    %13 = arith.addf %11, %12 : vector<5x32xf32>
    %cst_15 = arith.constant dense<0.000000e+00> : vector<5xf32>
    %14 = vector.multi_reduction <add>, %13, %cst_15 [1] : vector<5x32xf32> to vector<5xf32>
    %15 = vector.shape_cast %14 : vector<5xf32> to vector<5x1xf32>
    %cst_16 = arith.constant 3.200000e+01 : f32
    %16 = vector.broadcast %cst_16 : f32 to vector<5x1xf32>
    %17 = arith.divf %15, %16 : vector<5x1xf32>
    %18 = vector.broadcast %17 : vector<5x1xf32> to vector<5x32xf32>
    %19 = arith.subf %13, %18 : vector<5x32xf32>
    %20 = arith.mulf %19, %19 : vector<5x32xf32>
    %cst_17 = arith.constant dense<0.000000e+00> : vector<5xf32>
    %21 = vector.multi_reduction <add>, %20, %cst_17 [1] : vector<5x32xf32> to vector<5xf32>
    %22 = vector.shape_cast %21 : vector<5xf32> to vector<5x1xf32>
    %cst_18 = arith.constant 3.200000e+01 : f32
    %23 = vector.broadcast %cst_18 : f32 to vector<5x1xf32>
    %24 = arith.divf %22, %23 : vector<5x1xf32>
    %cst_19 = arith.constant 9.99999997E-7 : f32
    %25 = vector.broadcast %cst_19 : f32 to vector<5x1xf32>
    %26 = arith.addf %24, %25 : vector<5x1xf32>
    %27 = math.rsqrt %26 : vector<5x1xf32>
    %28 = vector.broadcast %27 : vector<5x1xf32> to vector<5x32xf32>
    %29 = arith.mulf %19, %28 : vector<5x32xf32>
    %c0_20 = arith.constant 0 : index
    %c0_21 = arith.constant 0 : index
    %30 = vector.load %arg6[%c0_20, %c0_21] : memref<1x32xf32, #tpu.memory_space<vmem>>, vector<1x32xf32>
    %31 = vector.broadcast %30 : vector<1x32xf32> to vector<5x32xf32>
    %32 = arith.mulf %29, %31 : vector<5x32xf32>
    %c0_22 = arith.constant 0 : index
    %c0_23 = arith.constant 0 : index
    %33 = vector.load %arg7[%c0_22, %c0_23] : memref<1x32xf32, #tpu.memory_space<vmem>>, vector<1x32xf32>
    %34 = vector.broadcast %33 : vector<1x32xf32> to vector<5x32xf32>
    %35 = arith.addf %32, %34 : vector<5x32xf32>
    %36 = arith.truncf %35 : vector<5x32xf32> to vector<5x32xbf16>
    %c0_24 = arith.constant 0 : index
    %c0_25 = arith.constant 0 : index
    %37 = vector.load %arg8[%c0_24, %c0_25] : memref<32x96xbf16, #tpu.memory_space<vmem>>, vector<32x96xbf16>
    %cst_26 = arith.constant dense<0.000000e+00> : vector<5x96xf32>
    %38 = tpu.matmul %36, %37, %cst_26 {dimension_numbers = #tpu.dot_dimension_numbers<[1], [0], [0], [1], [0, 0, 1, 1], [], []>} : vector<5x32xbf16>, vector<32x96xbf16>, vector<5x96xf32> -> vector<5x96xf32>
    %c0_27 = arith.constant 0 : index
    %c0_28 = arith.constant 0 : index
    %39 = vector.load %arg9[%c0_27, %c0_28] : memref<1x96xf32, #tpu.memory_space<vmem>>, vector<1x96xf32>
    %40 = vector.broadcast %39 : vector<1x96xf32> to vector<5x96xf32>
    %41 = arith.addf %38, %40 : vector<5x96xf32>
    %42 = vector.extract_strided_slice %41 {offsets = [0, 0], sizes = [5, 16], strides = [1, 1]} : vector<5x96xf32> to vector<5x16xf32>
    %43 = vector.extract_strided_slice %41 {offsets = [0, 32], sizes = [5, 16], strides = [1, 1]} : vector<5x96xf32> to vector<5x16xf32>
    %44 = vector.extract_strided_slice %41 {offsets = [0, 64], sizes = [5, 16], strides = [1, 1]} : vector<5x96xf32> to vector<5x16xf32>
    %45 = arith.truncf %42 : vector<5x16xf32> to vector<5x16xbf16>
    %46 = arith.truncf %43 : vector<5x16xf32> to vector<5x16xbf16>
    %cst_29 = arith.constant dense<0.000000e+00> : vector<5x5xf32>
    %47 = tpu.matmul %45, %46, %cst_29 {dimension_numbers = #tpu.dot_dimension_numbers<[1], [1], [0], [0], [0, 0, 1, 0], [], []>} : vector<5x16xbf16>, vector<5x16xbf16>, vector<5x5xf32> -> vector<5x5xf32>
    %cst_30 = arith.constant 2.500000e-01 : f32
    %48 = vector.broadcast %cst_30 : f32 to vector<5x5xf32>
    %49 = arith.mulf %47, %48 : vector<5x5xf32>
    %cst_31 = arith.constant dense<0xFF800000> : vector<5xf32>
    %50 = vector.multi_reduction <maximumf>, %49, %cst_31 [1] : vector<5x5xf32> to vector<5xf32>
    %51 = vector.shape_cast %50 : vector<5xf32> to vector<5x1xf32>
    %52 = vector.broadcast %51 : vector<5x1xf32> to vector<5x5xf32>
    %53 = arith.subf %49, %52 : vector<5x5xf32>
    %54 = math.exp %53 : vector<5x5xf32>
    %cst_32 = arith.constant dense<0.000000e+00> : vector<5xf32>
    %55 = vector.multi_reduction <add>, %54, %cst_32 [1] : vector<5x5xf32> to vector<5xf32>
    %56 = vector.shape_cast %55 : vector<5xf32> to vector<5x1xf32>
    %57 = tpu.reciprocal %56 {approx = true} : vector<5x1xf32> -> vector<5x1xf32>
    %58 = vector.broadcast %57 : vector<5x1xf32> to vector<5x5xf32>
    %59 = arith.mulf %54, %58 : vector<5x5xf32>
    %60 = arith.truncf %59 : vector<5x5xf32> to vector<5x5xbf16>
    %61 = arith.truncf %44 : vector<5x16xf32> to vector<5x16xbf16>
    %cst_33 = arith.constant dense<0.000000e+00> : vector<5x16xf32>
    %62 = tpu.matmul %60, %61, %cst_33 {dimension_numbers = #tpu.dot_dimension_numbers<[1], [0], [0], [1], [0, 0, 1, 1], [], []>} : vector<5x5xbf16>, vector<5x16xbf16>, vector<5x16xf32> -> vector<5x16xf32>
    %c0_34 = arith.constant 0 : index
    %c0_35 = arith.constant 0 : index
    %63 = vector.load %arg25[%c0_34, %c0_35] : memref<5x32xf32, #tpu.memory_space<vmem>>, vector<5x16xf32>
    tpu.vector_store %arg25[%c0_34, %c0_35], %62 {strides = array<i32>} : memref<5x32xf32, #tpu.memory_space<vmem>>, vector<5x16xf32>,
    %64 = vector.extract_strided_slice %41 {offsets = [0, 16], sizes = [5, 16], strides = [1, 1]} : vector<5x96xf32> to vector<5x16xf32>
    %65 = vector.extract_strided_slice %41 {offsets = [0, 48], sizes = [5, 16], strides = [1, 1]} : vector<5x96xf32> to vector<5x16xf32>
    %66 = vector.extract_strided_slice %41 {offsets = [0, 80], sizes = [5, 16], strides = [1, 1]} : vector<5x96xf32> to vector<5x16xf32>
    %67 = arith.truncf %64 : vector<5x16xf32> to vector<5x16xbf16>
    %68 = arith.truncf %65 : vector<5x16xf32> to vector<5x16xbf16>
    %cst_36 = arith.constant dense<0.000000e+00> : vector<5x5xf32>
    %69 = tpu.matmul %67, %68, %cst_36 {dimension_numbers = #tpu.dot_dimension_numbers<[1], [1], [0], [0], [0, 0, 1, 0], [], []>} : vector<5x16xbf16>, vector<5x16xbf16>, vector<5x5xf32> -> vector<5x5xf32>
    %cst_37 = arith.constant 2.500000e-01 : f32
    %70 = vector.broadcast %cst_37 : f32 to vector<5x5xf32>
    %71 = arith.mulf %69, %70 : vector<5x5xf32>
    %cst_38 = arith.constant dense<0xFF800000> : vector<5xf32>
    %72 = vector.multi_reduction <maximumf>, %71, %cst_38 [1] : vector<5x5xf32> to vector<5xf32>
    %73 = vector.shape_cast %72 : vector<5xf32> to vector<5x1xf32>
    %74 = vector.broadcast %73 : vector<5x1xf32> to vector<5x5xf32>
    %75 = arith.subf %71, %74 : vector<5x5xf32>
    %76 = math.exp %75 : vector<5x5xf32>
    %cst_39 = arith.constant dense<0.000000e+00> : vector<5xf32>
    %77 = vector.multi_reduction <add>, %76, %cst_39 [1] : vector<5x5xf32> to vector<5xf32>
    %78 = vector.shape_cast %77 : vector<5xf32> to vector<5x1xf32>
    %79 = tpu.reciprocal %78 {approx = true} : vector<5x1xf32> -> vector<5x1xf32>
    %80 = vector.broadcast %79 : vector<5x1xf32> to vector<5x5xf32>
    %81 = arith.mulf %76, %80 : vector<5x5xf32>
    %82 = arith.truncf %81 : vector<5x5xf32> to vector<5x5xbf16>
    %83 = arith.truncf %66 : vector<5x16xf32> to vector<5x16xbf16>
    %cst_40 = arith.constant dense<0.000000e+00> : vector<5x16xf32>
    %84 = tpu.matmul %82, %83, %cst_40 {dimension_numbers = #tpu.dot_dimension_numbers<[1], [0], [0], [1], [0, 0, 1, 1], [], []>} : vector<5x5xbf16>, vector<5x16xbf16>, vector<5x16xf32> -> vector<5x16xf32>
    %c0_41 = arith.constant 0 : index
    %c16 = arith.constant 16 : index
    %85 = vector.load %arg25[%c0_41, %c16] : memref<5x32xf32, #tpu.memory_space<vmem>>, vector<5x16xf32>
    tpu.vector_store %arg25[%c0_41, %c16], %84 {strides = array<i32>} : memref<5x32xf32, #tpu.memory_space<vmem>>, vector<5x16xf32>,
    %c0_42 = arith.constant 0 : index
    %c0_43 = arith.constant 0 : index
    %86 = vector.load %arg25[%c0_42, %c0_43] : memref<5x32xf32, #tpu.memory_space<vmem>>, vector<5x32xf32>
    %87 = arith.truncf %86 : vector<5x32xf32> to vector<5x32xbf16>
    %c0_44 = arith.constant 0 : index
    %c0_45 = arith.constant 0 : index
    %88 = vector.load %arg10[%c0_44, %c0_45] : memref<32x32xbf16, #tpu.memory_space<vmem>>, vector<32x32xbf16>
    %cst_46 = arith.constant dense<0.000000e+00> : vector<5x32xf32>
    %89 = tpu.matmul %87, %88, %cst_46 {dimension_numbers = #tpu.dot_dimension_numbers<[1], [0], [0], [1], [0, 0, 1, 1], [], []>} : vector<5x32xbf16>, vector<32x32xbf16>, vector<5x32xf32> -> vector<5x32xf32>
    %c0_47 = arith.constant 0 : index
    %c0_48 = arith.constant 0 : index
    %90 = vector.load %arg11[%c0_47, %c0_48] : memref<1x32xf32, #tpu.memory_space<vmem>>, vector<1x32xf32>
    %91 = vector.broadcast %90 : vector<1x32xf32> to vector<5x32xf32>
    %92 = arith.addf %89, %91 : vector<5x32xf32>
    %93 = arith.addf %13, %92 : vector<5x32xf32>
    %cst_49 = arith.constant dense<0.000000e+00> : vector<5xf32>
    %94 = vector.multi_reduction <add>, %93, %cst_49 [1] : vector<5x32xf32> to vector<5xf32>
    %95 = vector.shape_cast %94 : vector<5xf32> to vector<5x1xf32>
    %cst_50 = arith.constant 3.200000e+01 : f32
    %96 = vector.broadcast %cst_50 : f32 to vector<5x1xf32>
    %97 = arith.divf %95, %96 : vector<5x1xf32>
    %98 = vector.broadcast %97 : vector<5x1xf32> to vector<5x32xf32>
    %99 = arith.subf %93, %98 : vector<5x32xf32>
    %100 = arith.mulf %99, %99 : vector<5x32xf32>
    %cst_51 = arith.constant dense<0.000000e+00> : vector<5xf32>
    %101 = vector.multi_reduction <add>, %100, %cst_51 [1] : vector<5x32xf32> to vector<5xf32>
    %102 = vector.shape_cast %101 : vector<5xf32> to vector<5x1xf32>
    %cst_52 = arith.constant 3.200000e+01 : f32
    %103 = vector.broadcast %cst_52 : f32 to vector<5x1xf32>
    %104 = arith.divf %102, %103 : vector<5x1xf32>
    %cst_53 = arith.constant 9.99999997E-7 : f32
    %105 = vector.broadcast %cst_53 : f32 to vector<5x1xf32>
    %106 = arith.addf %104, %105 : vector<5x1xf32>
    %107 = math.rsqrt %106 : vector<5x1xf32>
    %108 = vector.broadcast %107 : vector<5x1xf32> to vector<5x32xf32>
    %109 = arith.mulf %99, %108 : vector<5x32xf32>
    %c0_54 = arith.constant 0 : index
    %c0_55 = arith.constant 0 : index
    %110 = vector.load %arg12[%c0_54, %c0_55] : memref<1x32xf32, #tpu.memory_space<vmem>>, vector<1x32xf32>
    %111 = vector.broadcast %110 : vector<1x32xf32> to vector<5x32xf32>
    %112 = arith.mulf %109, %111 : vector<5x32xf32>
    %c0_56 = arith.constant 0 : index
    %c0_57 = arith.constant 0 : index
    %113 = vector.load %arg13[%c0_56, %c0_57] : memref<1x32xf32, #tpu.memory_space<vmem>>, vector<1x32xf32>
    %114 = vector.broadcast %113 : vector<1x32xf32> to vector<5x32xf32>
    %115 = arith.addf %112, %114 : vector<5x32xf32>
    %116 = arith.truncf %115 : vector<5x32xf32> to vector<5x32xbf16>
    %c0_58 = arith.constant 0 : index
    %c0_59 = arith.constant 0 : index
    %117 = vector.load %arg14[%c0_58, %c0_59] : memref<32x64xbf16, #tpu.memory_space<vmem>>, vector<32x64xbf16>
    %cst_60 = arith.constant dense<0.000000e+00> : vector<5x64xf32>
    %118 = tpu.matmul %116, %117, %cst_60 {dimension_numbers = #tpu.dot_dimension_numbers<[1], [0], [0], [1], [0, 0, 1, 1], [], []>} : vector<5x32xbf16>, vector<32x64xbf16>, vector<5x64xf32> -> vector<5x64xf32>
    %c0_61 = arith.constant 0 : index
    %c0_62 = arith.constant 0 : index
    %119 = vector.load %arg15[%c0_61, %c0_62] : memref<1x64xf32, #tpu.memory_space<vmem>>, vector<1x64xf32>
    %120 = vector.broadcast %119 : vector<1x64xf32> to vector<5x64xf32>
    %121 = arith.addf %118, %120 : vector<5x64xf32>
    %122 = arith.mulf %121, %121 : vector<5x64xf32>
    %123 = arith.mulf %121, %122 : vector<5x64xf32>
    %cst_63 = arith.constant 4.471500e-02 : f32
    %124 = vector.broadcast %cst_63 : f32 to vector<5x64xf32>
    %125 = arith.mulf %124, %123 : vector<5x64xf32>
    %126 = arith.addf %121, %125 : vector<5x64xf32>
    %cst_64 = arith.constant 0.797884583 : f32
    %127 = vector.broadcast %cst_64 : f32 to vector<5x64xf32>
    %128 = arith.mulf %127, %126 : vector<5x64xf32>
    %129 = math.tanh %128 : vector<5x64xf32>
    %cst_65 = arith.constant 1.000000e+00 : f32
    %130 = vector.broadcast %cst_65 : f32 to vector<5x64xf32>
    %131 = arith.addf %130, %129 : vector<5x64xf32>
    %cst_66 = arith.constant 5.000000e-01 : f32
    %132 = vector.broadcast %cst_66 : f32 to vector<5x64xf32>
    %133 = arith.mulf %132, %131 : vector<5x64xf32>
    %134 = arith.mulf %121, %133 : vector<5x64xf32>
    %135 = arith.truncf %134 : vector<5x64xf32> to vector<5x64xbf16>
    %c0_67 = arith.constant 0 : index
    %c0_68 = arith.constant 0 : index
    %136 = vector.load %arg16[%c0_67, %c0_68] : memref<64x32xbf16, #tpu.memory_space<vmem>>, vector<64x32xbf16>
    %cst_69 = arith.constant dense<0.000000e+00> : vector<5x32xf32>
    %137 = tpu.matmul %135, %136, %cst_69 {dimension_numbers = #tpu.dot_dimension_numbers<[1], [0], [0], [1], [0, 0, 1, 1], [], []>} : vector<5x64xbf16>, vector<64x32xbf16>, vector<5x32xf32> -> vector<5x32xf32>
    %c0_70 = arith.constant 0 : index
    %c0_71 = arith.constant 0 : index
    %138 = vector.load %arg17[%c0_70, %c0_71] : memref<1x32xf32, #tpu.memory_space<vmem>>, vector<1x32xf32>
    %139 = vector.broadcast %138 : vector<1x32xf32> to vector<5x32xf32>
    %140 = arith.addf %137, %139 : vector<5x32xf32>
    %141 = arith.addf %93, %140 : vector<5x32xf32>
    %cst_72 = arith.constant dense<0.000000e+00> : vector<5xf32>
    %142 = vector.multi_reduction <add>, %141, %cst_72 [1] : vector<5x32xf32> to vector<5xf32>
    %143 = vector.shape_cast %142 : vector<5xf32> to vector<5x1xf32>
    %cst_73 = arith.constant 3.200000e+01 : f32
    %144 = vector.broadcast %cst_73 : f32 to vector<5x1xf32>
    %145 = arith.divf %143, %144 : vector<5x1xf32>
    %146 = vector.broadcast %145 : vector<5x1xf32> to vector<5x32xf32>
    %147 = arith.subf %141, %146 : vector<5x32xf32>
    %148 = arith.mulf %147, %147 : vector<5x32xf32>
    %cst_74 = arith.constant dense<0.000000e+00> : vector<5xf32>
    %149 = vector.multi_reduction <add>, %148, %cst_74 [1] : vector<5x32xf32> to vector<5xf32>
    %150 = vector.shape_cast %149 : vector<5xf32> to vector<5x1xf32>
    %cst_75 = arith.constant 3.200000e+01 : f32
    %151 = vector.broadcast %cst_75 : f32 to vector<5x1xf32>
    %152 = arith.divf %150, %151 : vector<5x1xf32>
    %cst_76 = arith.constant 9.99999997E-7 : f32
    %153 = vector.broadcast %cst_76 : f32 to vector<5x1xf32>
    %154 = arith.addf %152, %153 : vector<5x1xf32>
    %155 = math.rsqrt %154 : vector<5x1xf32>
    %156 = vector.broadcast %155 : vector<5x1xf32> to vector<5x32xf32>
    %157 = arith.mulf %147, %156 : vector<5x32xf32>
    %c0_77 = arith.constant 0 : index
    %c0_78 = arith.constant 0 : index
    %158 = vector.load %arg18[%c0_77, %c0_78] : memref<1x32xf32, #tpu.memory_space<vmem>>, vector<1x32xf32>
    %159 = vector.broadcast %158 : vector<1x32xf32> to vector<5x32xf32>
    %160 = arith.mulf %157, %159 : vector<5x32xf32>
    %c0_79 = arith.constant 0 : index
    %c0_80 = arith.constant 0 : index
    %161 = vector.load %arg19[%c0_79, %c0_80] : memref<1x32xf32, #tpu.memory_space<vmem>>, vector<1x32xf32>
    %162 = vector.broadcast %161 : vector<1x32xf32> to vector<5x32xf32>
    %163 = arith.addf %160, %162 : vector<5x32xf32>
    %164 = vector.extract_strided_slice %163 {offsets = [1, 0], sizes = [4, 32], strides = [1, 1]} : vector<5x32xf32> to vector<4x32xf32>
    %c0_81 = arith.constant 0 : index
    %c0_82 = arith.constant 0 : index
    %165 = vector.load %arg20[%c0_81, %c0_82] : memref<4x32xf32, #tpu.memory_space<vmem>>, vector<4x32xf32>
    %cst_83 = arith.constant dense<0.000000e+00> : vector<4x4xf32>
    %166 = tpu.matmul %165, %164, %cst_83 {dimension_numbers = #tpu.dot_dimension_numbers<[1], [1], [0], [0], [0, 0, 1, 0], [], []>} : vector<4x32xf32>, vector<4x32xf32>, vector<4x4xf32> -> vector<4x4xf32>
    %c0_84 = arith.constant 0 : index
    %c0_85 = arith.constant 0 : index
    %167 = vector.load %arg21[%c0_84, %c0_85] : memref<4x1xf32, #tpu.memory_space<vmem>>, vector<4x1xf32>
    %168 = vector.broadcast %167 : vector<4x1xf32> to vector<4x4xf32>
    %169 = arith.addf %166, %168 : vector<4x4xf32>
    %c0_86 = arith.constant 0 : index
    %c0_87 = arith.constant 0 : index
    %170 = vector.load %arg22[%c0_86, %c0_87] : memref<4x256xf32, #tpu.memory_space<vmem>>, vector<4x256xf32>
    %cst_88 = arith.constant dense<0.000000e+00> : vector<4x256xf32>
    %171 = tpu.matmul %169, %170, %cst_88 {dimension_numbers = #tpu.dot_dimension_numbers<[1], [0], [0], [1], [0, 0, 1, 1], [], []>} : vector<4x4xf32>, vector<4x256xf32>, vector<4x256xf32> -> vector<4x256xf32>
    %c0_89 = arith.constant 0 : index
    %c0_90 = arith.constant 0 : index
    %c0_91 = arith.constant 0 : index
    %172 = vector.load %arg23[%c0_89, %c0_90, %c0_91] : memref<1x4x256xf32, #tpu.memory_space<vmem>>, vector<1x4x256xf32>
    %173 = vector.shape_cast %172 : vector<1x4x256xf32> to vector<4x256xf32>
    %174 = vector.shape_cast %171 : vector<4x256xf32> to vector<1x4x256xf32>
    tpu.vector_store %arg23[%c0_89, %c0_90, %c0_91], %174 {strides = array<i32>} : memref<1x4x256xf32, #tpu.memory_space<vmem>>, vector<1x4x256xf32>,
    return
  }
  func.func @transform_0(%arg0: i32) -> (i32, i32, i32) {
    %c0_i32 = arith.constant 0 : i32
    %c0_i32_0 = arith.constant 0 : i32
    %c0_i32_1 = arith.constant 0 : i32
    return %arg0, %c0_i32, %c0_i32_0 : i32, i32, i32
  }
  func.func @transform_1(%arg0: i32) -> (i32, i32) {
    %c0_i32 = arith.constant 0 : i32
    %c0_i32_0 = arith.constant 0 : i32
    %c0_i32_1 = arith.constant 0 : i32
    return %c0_i32, %c0_i32_0 : i32, i32
  }
  func.func @transform_2(%arg0: i32) -> (i32, i32) {
    %c0_i32 = arith.constant 0 : i32
    %c0_i32_0 = arith.constant 0 : i32
    %c0_i32_1 = arith.constant 0 : i32
    return %c0_i32, %c0_i32_0 : i32, i32
  }
  func.func @transform_3(%arg0: i32) -> (i32, i32) {
    %c0_i32 = arith.constant 0 : i32
    %c0_i32_0 = arith.constant 0 : i32
    %c0_i32_1 = arith.constant 0 : i32
    return %c0_i32, %c0_i32_0 : i32, i32
  }
  func.func @transform_4(%arg0: i32) -> (i32, i32) {
    %c0_i32 = arith.constant 0 : i32
    %c0_i32_0 = arith.constant 0 : i32
    %c0_i32_1 = arith.constant 0 : i32
    return %c0_i32, %c0_i32_0 : i32, i32
  }
  func.func @transform_5(%arg0: i32) -> (i32, i32) {
    %c0_i32 = arith.constant 0 : i32
    %c0_i32_0 = arith.constant 0 : i32
    %c0_i32_1 = arith.constant 0 : i32
    return %c0_i32, %c0_i32_0 : i32, i32
  }
  func.func @transform_6(%arg0: i32) -> (i32, i32) {
    %c0_i32 = arith.constant 0 : i32
    %c0_i32_0 = arith.constant 0 : i32
    %c0_i32_1 = arith.constant 0 : i32
    return %c0_i32, %c0_i32_0 : i32, i32
  }
  func.func @transform_7(%arg0: i32) -> (i32, i32) {
    %c0_i32 = arith.constant 0 : i32
    %c0_i32_0 = arith.constant 0 : i32
    %c0_i32_1 = arith.constant 0 : i32
    return %c0_i32, %c0_i32_0 : i32, i32
  }
  func.func @transform_8(%arg0: i32) -> (i32, i32) {
    %c0_i32 = arith.constant 0 : i32
    %c0_i32_0 = arith.constant 0 : i32
    %c0_i32_1 = arith.constant 0 : i32
    return %c0_i32, %c0_i32_0 : i32, i32
  }
  func.func @transform_9(%arg0: i32) -> (i32, i32) {
    %c0_i32 = arith.constant 0 : i32
    %c0_i32_0 = arith.constant 0 : i32
    %c0_i32_1 = arith.constant 0 : i32
    return %c0_i32, %c0_i32_0 : i32, i32
  }
  func.func @transform_10(%arg0: i32) -> (i32, i32) {
    %c0_i32 = arith.constant 0 : i32
    %c0_i32_0 = arith.constant 0 : i32
    %c0_i32_1 = arith.constant 0 : i32
    return %c0_i32, %c0_i32_0 : i32, i32
  }
  func.func @transform_11(%arg0: i32) -> (i32, i32) {
    %c0_i32 = arith.constant 0 : i32
    %c0_i32_0 = arith.constant 0 : i32
    %c0_i32_1 = arith.constant 0 : i32
    return %c0_i32, %c0_i32_0 : i32, i32
  }
  func.func @transform_12(%arg0: i32) -> (i32, i32) {
    %c0_i32 = arith.constant 0 : i32
    %c0_i32_0 = arith.constant 0 : i32
    %c0_i32_1 = arith.constant 0 : i32
    return %c0_i32, %c0_i32_0 : i32, i32
  }
  func.func @transform_13(%arg0: i32) -> (i32, i32) {
    %c0_i32 = arith.constant 0 : i32
    %c0_i32_0 = arith.constant 0 : i32
    %c0_i32_1 = arith.constant 0 : i32
    return %c0_i32, %c0_i32_0 : i32, i32
  }
  func.func @transform_14(%arg0: i32) -> (i32, i32) {
    %c0_i32 = arith.constant 0 : i32
    %c0_i32_0 = arith.constant 0 : i32
    %c0_i32_1 = arith.constant 0 : i32
    return %c0_i32, %c0_i32_0 : i32, i32
  }
  func.func @transform_15(%arg0: i32) -> (i32, i32) {
    %c0_i32 = arith.constant 0 : i32
    %c0_i32_0 = arith.constant 0 : i32
    %c0_i32_1 = arith.constant 0 : i32
    return %c0_i32, %c0_i32_0 : i32, i32
  }
  func.func @transform_16(%arg0: i32) -> (i32, i32) {
    %c0_i32 = arith.constant 0 : i32
    %c0_i32_0 = arith.constant 0 : i32
    %c0_i32_1 = arith.constant 0 : i32
    return %c0_i32, %c0_i32_0 : i32, i32
  }
  func.func @transform_17(%arg0: i32) -> (i32, i32) {
    %c0_i32 = arith.constant 0 : i32
    %c0_i32_0 = arith.constant 0 : i32
    %c0_i32_1 = arith.constant 0 : i32
    return %c0_i32, %c0_i32_0 : i32, i32
  }
  func.func @transform_18(%arg0: i32) -> (i32, i32) {
    %c0_i32 = arith.constant 0 : i32
    %c0_i32_0 = arith.constant 0 : i32
    %c0_i32_1 = arith.constant 0 : i32
    return %c0_i32, %c0_i32_0 : i32, i32
  }
  func.func @transform_19(%arg0: i32) -> (i32, i32) {
    %c0_i32 = arith.constant 0 : i32
    %c0_i32_0 = arith.constant 0 : i32
    %c0_i32_1 = arith.constant 0 : i32
    return %c0_i32, %c0_i32_0 : i32, i32
  }
  func.func @transform_20(%arg0: i32) -> (i32, i32) {
    %c0_i32 = arith.constant 0 : i32
    %c0_i32_0 = arith.constant 0 : i32
    %c0_i32_1 = arith.constant 0 : i32
    return %c0_i32, %c0_i32_0 : i32, i32
  }
  func.func @transform_21(%arg0: i32) -> (i32, i32) {
    %c0_i32 = arith.constant 0 : i32
    %c0_i32_0 = arith.constant 0 : i32
    %c0_i32_1 = arith.constant 0 : i32
    return %c0_i32, %c0_i32_0 : i32, i32
  }
  func.func @transform_22(%arg0: i32) -> (i32, i32, i32) {
    %c0_i32 = arith.constant 0 : i32
    %c0_i32_0 = arith.constant 0 : i32
    %c0_i32_1 = arith.constant 0 : i32
    return %arg0, %c0_i32, %c0_i32_0 : i32, i32, i32
  }
}

</mosaic_0001>

<llo_original>
// kernel: segmenter_forward.1
$region0: #{segmenter_forward.1}
  #allocation0 [shape = 'u32[]', space=smem, size = 0x4, offset = 0x4, fixed_abs, tag = 'smem constant byte address 0x4 - core index']
  #allocation1 [shape = 'u32[144,128]{1,0:T(1,128)}', space=vmem, size = 0x12000, scoped, tag = 'internal scratch']
  #allocation2 [shape = 'f32[5,32]{1,0:T(8,128)}', space=vmem, size = 0x1000, scoped, tag = 'scratch operand']
  #allocation3 [shape = 'f32[5,32]{1,0:T(8,128)}', space=vmem, size = 0x1000, scoped, tag = 'scratch operand']
  %s0 = inlined_call_operand.vmem [shape: f32[2,4,192], index: 0, kind: input, shape index: {}]
  %s1 = inlined_call_operand.vmem [shape: f32[1,32], index: 1, kind: input, shape index: {}]
  %s2 = inlined_call_operand.vmem [shape: f32[5,32], index: 2, kind: input, shape index: {}]
  %s3 = inlined_call_operand.vmem [shape: bf16[192,32], index: 3, kind: input, shape index: {}]
  %s4 = inlined_call_operand.vmem [shape: f32[1,32], index: 4, kind: input, shape index: {}]
  %s5 = inlined_call_operand.vmem [shape: f32[1,32], index: 5, kind: input, shape index: {}]
  %s6 = inlined_call_operand.vmem [shape: f32[1,32], index: 6, kind: input, shape index: {}]
  %s7 = inlined_call_operand.vmem [shape: bf16[32,96], index: 7, kind: input, shape index: {}]
  %s8 = inlined_call_operand.vmem [shape: f32[1,96], index: 8, kind: input, shape index: {}]
  %s9 = inlined_call_operand.vmem [shape: bf16[32,32], index: 9, kind: input, shape index: {}]
  %s10 = inlined_call_operand.vmem [shape: f32[1,32], index: 10, kind: input, shape index: {}]
  %s11 = inlined_call_operand.vmem [shape: f32[1,32], index: 11, kind: input, shape index: {}]
  %s12 = inlined_call_operand.vmem [shape: f32[1,32], index: 12, kind: input, shape index: {}]
  %s13 = inlined_call_operand.vmem [shape: bf16[32,64], index: 13, kind: input, shape index: {}]
  %s14 = inlined_call_operand.vmem [shape: f32[1,64], index: 14, kind: input, shape index: {}]
  %s15 = inlined_call_operand.vmem [shape: bf16[64,32], index: 15, kind: input, shape index: {}]
  %s16 = inlined_call_operand.vmem [shape: f32[1,32], index: 16, kind: input, shape index: {}]
  %s17 = inlined_call_operand.vmem [shape: f32[1,32], index: 17, kind: input, shape index: {}]
  %s18 = inlined_call_operand.vmem [shape: f32[1,32], index: 18, kind: input, shape index: {}]
  %s19 = inlined_call_operand.vmem [shape: f32[4,32], index: 19, kind: input, shape index: {}]
  %s20 = inlined_call_operand.vmem [shape: f32[4,1], index: 20, kind: input, shape index: {}]
  %s21 = inlined_call_operand.vmem [shape: f32[4,256], index: 21, kind: input, shape index: {}]
  %s22 = inlined_call_operand.vmem [shape: f32[2,4,256], index: 22, kind: output, shape index: {}]
  %s23 = sld [smem:[#allocation0]]
  $region121: #{segmenter_forward.1} parent=0
    _
  %s25 = ssub.s32 1, %s23
  %s26 = scalar_select 0, %s25, %s23
  loop: start=0, step=1, limit=4
  $region2: #{segmenter_forward.1} parent=0 // loop_pre_header
    _
  $region3: #{segmenter_forward.1} parent=0 // loop_header
    %s28 = sphi 0, %s32
    %p29 = scmp.ge.s32.totalorder %s28, 4
    %s38 = sphi 0, %s40
    %s41 = sphi 0, %s38
    %s42 = sphi 0, %s41
    %s58 = sphi 0, %s42
    %s62 = sphi 0, %s62
    %s64 = sphi 0, %s62
    %s65 = sphi 0, %s64
    %s79 = sphi 0, %s65
    %s83 = sphi 0, %s83
    %s85 = sphi 0, %s83
    %s86 = sphi 0, %s85
    %s100 = sphi 0, %s86
    %s104 = sphi 0, %s104
    %s106 = sphi 0, %s104
    %s107 = sphi 0, %s106
    %s121 = sphi 0, %s107
    %s125 = sphi 0, %s125
    %s127 = sphi 0, %s125
    %s128 = sphi 0, %s127
    %s142 = sphi 0, %s128
    %s146 = sphi 0, %s146
    %s148 = sphi 0, %s146
    %s149 = sphi 0, %s148
    %s163 = sphi 0, %s149
    %s167 = sphi 0, %s167
    %s169 = sphi 0, %s167
    %s170 = sphi 0, %s169
    %s184 = sphi 0, %s170
    %s188 = sphi 0, %s188
    %s190 = sphi 0, %s188
    %s191 = sphi 0, %s190
    %s205 = sphi 0, %s191
    %s209 = sphi 0, %s209
    %s211 = sphi 0, %s209
    %s212 = sphi 0, %s211
    %s226 = sphi 0, %s212
    %s230 = sphi 0, %s230
    %s232 = sphi 0, %s230
    %s233 = sphi 0, %s232
    %s247 = sphi 0, %s233
    %s251 = sphi 0, %s251
    %s253 = sphi 0, %s251
    %s254 = sphi 0, %s253
    %s268 = sphi 0, %s254
    %s272 = sphi 0, %s272
    %s274 = sphi 0, %s272
    %s275 = sphi 0, %s274
    %s289 = sphi 0, %s275
    %s293 = sphi 0, %s293
    %s295 = sphi 0, %s293
    %s296 = sphi 0, %s295
    %s310 = sphi 0, %s296
    %s314 = sphi 0, %s314
    %s316 = sphi 0, %s314
    %s317 = sphi 0, %s316
    %s331 = sphi 0, %s317
    %s335 = sphi 0, %s335
    %s337 = sphi 0, %s335
    %s338 = sphi 0, %s337
    %s352 = sphi 0, %s338
    %s356 = sphi 0, %s356
    %s358 = sphi 0, %s356
    %s359 = sphi 0, %s358
    %s373 = sphi 0, %s359
    %s377 = sphi 0, %s377
    %s379 = sphi 0, %s377
    %s380 = sphi 0, %s379
    %s394 = sphi 0, %s380
    %s398 = sphi 0, %s398
    %s400 = sphi 0, %s398
    %s401 = sphi 0, %s400
    %s415 = sphi 0, %s401
    %s419 = sphi 0, %s419
    %s421 = sphi 0, %s419
    %s422 = sphi 0, %s421
    %s436 = sphi 0, %s422
    %s440 = sphi 0, %s440
    %s442 = sphi 0, %s440
    %s443 = sphi 0, %s442
    %s457 = sphi 0, %s443
    %s461 = sphi 0, %s461
    %s463 = sphi 0, %s461
    %s464 = sphi 0, %s463
    %s478 = sphi 0, %s464
    %s482 = sphi 0, %s482
    %s484 = sphi 0, %s482
    %s485 = sphi 0, %s484
    %s499 = sphi 0, %s485
    %s505 = sphi 0, %s507
    %s508 = sphi 0, %s505
    %s509 = sphi 0, %s508
    %s525 = sphi 0, %s509
  $region4: #{segmenter_forward.1} parent=0 // loop_header_branch
    %31 = sbr.rel (%p29) target = $region8
  $region5: #{segmenter_forward.1} parent=0 // loop_body
    %s33 = ssub.s32 %s28, 1
    %s34 = ssub.s32 %s28, 2
    %s35 = sadd.s32 %s28, 1
    %s36 = ssub.s32 %s28, %s35
    %p37 = scmp.eq.s32.totalorder %s36, 0
    %s39 = sadd.s32 %s38, 1
    %s40 = scalar_select %p37, %s38, %s39
    %p43 = pneg %p37
    %p44 = scmp.eq.s32.totalorder %s28, 1
    %p45 = por %p43, %p44
    %p46 = scmp.ne.s32.totalorder %s38, %s41
    %p47 = scmp.eq.s32.totalorder %s28, 0
    %p48 = por %p46, %p47
    %p49 = scmp.ne.s32.totalorder %s38, %s41
    %p50 = scmp.eq.s32.totalorder %s33, 1
    %p51 = por %p49, %p50
    %p52 = scmp.ne.s32.totalorder %s41, %s42
    %p53 = scmp.eq.s32.totalorder %s33, 0
    %p54 = por %p52, %p53
    %p55 = scmp.ne.s32.totalorder %s41, %s42
    %p56 = scmp.eq.s32.totalorder %s34, 1
    %p57 = por %p55, %p56
    %p59 = scmp.ne.s32.totalorder %s42, %s58
    %p60 = scmp.eq.s32.totalorder %s34, 0
    %p61 = por %p59, %p60
    %s63 = sadd.s32 %s62, 1
    %p66 = scmp.eq.s32.totalorder %s28, 1
    %p67 = scmp.ne.s32.totalorder %s62, %s64
    %p68 = scmp.eq.s32.totalorder %s28, 0
    %p69 = por %p67, %p68
    %p70 = scmp.ne.s32.totalorder %s62, %s64
    %p71 = scmp.eq.s32.totalorder %s33, 1
    %p72 = por %p70, %p71
    %p73 = scmp.ne.s32.totalorder %s64, %s65
    %p74 = scmp.eq.s32.totalorder %s33, 0
    %p75 = por %p73, %p74
    %p76 = scmp.ne.s32.totalorder %s64, %s65
    %p77 = scmp.eq.s32.totalorder %s34, 1
    %p78 = por %p76, %p77
    %p80 = scmp.ne.s32.totalorder %s65, %s79
    %p81 = scmp.eq.s32.totalorder %s34, 0
    %p82 = por %p80, %p81
    %s84 = sadd.s32 %s83, 1
    %p87 = scmp.eq.s32.totalorder %s28, 1
    %p88 = scmp.ne.s32.totalorder %s83, %s85
    %p89 = scmp.eq.s32.totalorder %s28, 0
    %p90 = por %p88, %p89
    %p91 = scmp.ne.s32.totalorder %s83, %s85
    %p92 = scmp.eq.s32.totalorder %s33, 1
    %p93 = por %p91, %p92
    %p94 = scmp.ne.s32.totalorder %s85, %s86
    %p95 = scmp.eq.s32.totalorder %s33, 0
    %p96 = por %p94, %p95
    %p97 = scmp.ne.s32.totalorder %s85, %s86
    %p98 = scmp.eq.s32.totalorder %s34, 1
    %p99 = por %p97, %p98
    %p101 = scmp.ne.s32.totalorder %s86, %s100
    %p102 = scmp.eq.s32.totalorder %s34, 0
    %p103 = por %p101, %p102
    %s105 = sadd.s32 %s104, 1
    %p108 = scmp.eq.s32.totalorder %s28, 1
    %p109 = scmp.ne.s32.totalorder %s104, %s106
    %p110 = scmp.eq.s32.totalorder %s28, 0
    %p111 = por %p109, %p110
    %p112 = scmp.ne.s32.totalorder %s104, %s106
    %p113 = scmp.eq.s32.totalorder %s33, 1
    %p114 = por %p112, %p113
    %p115 = scmp.ne.s32.totalorder %s106, %s107
    %p116 = scmp.eq.s32.totalorder %s33, 0
    %p117 = por %p115, %p116
    %p118 = scmp.ne.s32.totalorder %s106, %s107
    %p119 = scmp.eq.s32.totalorder %s34, 1
    %p120 = por %p118, %p119
    %p122 = scmp.ne.s32.totalorder %s107, %s121
    %p123 = scmp.eq.s32.totalorder %s34, 0
    %p124 = por %p122, %p123
    %s126 = sadd.s32 %s125, 1
    %p129 = scmp.eq.s32.totalorder %s28, 1
    %p130 = scmp.ne.s32.totalorder %s125, %s127
    %p131 = scmp.eq.s32.totalorder %s28, 0
    %p132 = por %p130, %p131
    %p133 = scmp.ne.s32.totalorder %s125, %s127
    %p134 = scmp.eq.s32.totalorder %s33, 1
    %p135 = por %p133, %p134
    %p136 = scmp.ne.s32.totalorder %s127, %s128
    %p137 = scmp.eq.s32.totalorder %s33, 0
    %p138 = por %p136, %p137
    %p139 = scmp.ne.s32.totalorder %s127, %s128
    %p140 = scmp.eq.s32.totalorder %s34, 1
    %p141 = por %p139, %p140
    %p143 = scmp.ne.s32.totalorder %s128, %s142
    %p144 = scmp.eq.s32.totalorder %s34, 0
    %p145 = por %p143, %p144
    %s147 = sadd.s32 %s146, 1
    %p150 = scmp.eq.s32.totalorder %s28, 1
    %p151 = scmp.ne.s32.totalorder %s146, %s148
    %p152 = scmp.eq.s32.totalorder %s28, 0
    %p153 = por %p151, %p152
    %p154 = scmp.ne.s32.totalorder %s146, %s148
    %p155 = scmp.eq.s32.totalorder %s33, 1
    %p156 = por %p154, %p155
    %p157 = scmp.ne.s32.totalorder %s148, %s149
    %p158 = scmp.eq.s32.totalorder %s33, 0
    %p159 = por %p157, %p158
    %p160 = scmp.ne.s32.totalorder %s148, %s149
    %p161 = scmp.eq.s32.totalorder %s34, 1
    %p162 = por %p160, %p161
    %p164 = scmp.ne.s32.totalorder %s149, %s163
    %p165 = scmp.eq.s32.totalorder %s34, 0
    %p166 = por %p164, %p165
    %s168 = sadd.s32 %s167, 1
    %p171 = scmp.eq.s32.totalorder %s28, 1
    %p172 = scmp.ne.s32.totalorder %s167, %s169
    %p173 = scmp.eq.s32.totalorder %s28, 0
    %p174 = por %p172, %p173
    %p175 = scmp.ne.s32.totalorder %s167, %s169
    %p176 = scmp.eq.s32.totalorder %s33, 1
    %p177 = por %p175, %p176
    %p178 = scmp.ne.s32.totalorder %s169, %s170
    %p179 = scmp.eq.s32.totalorder %s33, 0
    %p180 = por %p178, %p179
    %p181 = scmp.ne.s32.totalorder %s169, %s170
    %p182 = scmp.eq.s32.totalorder %s34, 1
    %p183 = por %p181, %p182
    %p185 = scmp.ne.s32.totalorder %s170, %s184
    %p186 = scmp.eq.s32.totalorder %s34, 0
    %p187 = por %p185, %p186
    %s189 = sadd.s32 %s188, 1
    %p192 = scmp.eq.s32.totalorder %s28, 1
    %p193 = scmp.ne.s32.totalorder %s188, %s190
    %p194 = scmp.eq.s32.totalorder %s28, 0
    %p195 = por %p193, %p194
    %p196 = scmp.ne.s32.totalorder %s188, %s190
    %p197 = scmp.eq.s32.totalorder %s33, 1
    %p198 = por %p196, %p197
    %p199 = scmp.ne.s32.totalorder %s190, %s191
    %p200 = scmp.eq.s32.totalorder %s33, 0
    %p201 = por %p199, %p200
    %p202 = scmp.ne.s32.totalorder %s190, %s191
    %p203 = scmp.eq.s32.totalorder %s34, 1
    %p204 = por %p202, %p203
    %p206 = scmp.ne.s32.totalorder %s191, %s205
    %p207 = scmp.eq.s32.totalorder %s34, 0
    %p208 = por %p206, %p207
    %s210 = sadd.s32 %s209, 1
    %p213 = scmp.eq.s32.totalorder %s28, 1
    %p214 = scmp.ne.s32.totalorder %s209, %s211
    %p215 = scmp.eq.s32.totalorder %s28, 0
    %p216 = por %p214, %p215
    %p217 = scmp.ne.s32.totalorder %s209, %s211
    %p218 = scmp.eq.s32.totalorder %s33, 1
    %p219 = por %p217, %p218
    %p220 = scmp.ne.s32.totalorder %s211, %s212
    %p221 = scmp.eq.s32.totalorder %s33, 0
    %p222 = por %p220, %p221
    %p223 = scmp.ne.s32.totalorder %s211, %s212
    %p224 = scmp.eq.s32.totalorder %s34, 1
    %p225 = por %p223, %p224
    %p227 = scmp.ne.s32.totalorder %s212, %s226
    %p228 = scmp.eq.s32.totalorder %s34, 0
    %p229 = por %p227, %p228
    %s231 = sadd.s32 %s230, 1
    %p234 = scmp.eq.s32.totalorder %s28, 1
    %p235 = scmp.ne.s32.totalorder %s230, %s232
    %p236 = scmp.eq.s32.totalorder %s28, 0
    %p237 = por %p235, %p236
    %p238 = scmp.ne.s32.totalorder %s230, %s232
    %p239 = scmp.eq.s32.totalorder %s33, 1
    %p240 = por %p238, %p239
    %p241 = scmp.ne.s32.totalorder %s232, %s233
    %p242 = scmp.eq.s32.totalorder %s33, 0
    %p243 = por %p241, %p242
    %p244 = scmp.ne.s32.totalorder %s232, %s233
    %p245 = scmp.eq.s32.totalorder %s34, 1
    %p246 = por %p244, %p245
    %p248 = scmp.ne.s32.totalorder %s233, %s247
    %p249 = scmp.eq.s32.totalorder %s34, 0
    %p250 = por %p248, %p249
    %s252 = sadd.s32 %s251, 1
    %p255 = scmp.eq.s32.totalorder %s28, 1
    %p256 = scmp.ne.s32.totalorder %s251, %s253
    %p257 = scmp.eq.s32.totalorder %s28, 0
    %p258 = por %p256, %p257
    %p259 = scmp.ne.s32.totalorder %s251, %s253
    %p260 = scmp.eq.s32.totalorder %s33, 1
    %p261 = por %p259, %p260
    %p262 = scmp.ne.s32.totalorder %s253, %s254
    %p263 = scmp.eq.s32.totalorder %s33, 0
    %p264 = por %p262, %p263
    %p265 = scmp.ne.s32.totalorder %s253, %s254
    %p266 = scmp.eq.s32.totalorder %s34, 1
    %p267 = por %p265, %p266
    %p269 = scmp.ne.s32.totalorder %s254, %s268
    %p270 = scmp.eq.s32.totalorder %s34, 0
    %p271 = por %p269, %p270
    %s273 = sadd.s32 %s272, 1
    %p276 = scmp.eq.s32.totalorder %s28, 1
    %p277 = scmp.ne.s32.totalorder %s272, %s274
    %p278 = scmp.eq.s32.totalorder %s28, 0
    %p279 = por %p277, %p278
    %p280 = scmp.ne.s32.totalorder %s272, %s274
    %p281 = scmp.eq.s32.totalorder %s33, 1
    %p282 = por %p280, %p281
    %p283 = scmp.ne.s32.totalorder %s274, %s275
    %p284 = scmp.eq.s32.totalorder %s33, 0
    %p285 = por %p283, %p284
    %p286 = scmp.ne.s32.totalorder %s274, %s275
    %p287 = scmp.eq.s32.totalorder %s34, 1
    %p288 = por %p286, %p287
    %p290 = scmp.ne.s32.totalorder %s275, %s289
    %p291 = scmp.eq.s32.totalorder %s34, 0
    %p292 = por %p290, %p291
    %s294 = sadd.s32 %s293, 1
    %p297 = scmp.eq.s32.totalorder %s28, 1
    %p298 = scmp.ne.s32.totalorder %s293, %s295
    %p299 = scmp.eq.s32.totalorder %s28, 0
    %p300 = por %p298, %p299
    %p301 = scmp.ne.s32.totalorder %s293, %s295
    %p302 = scmp.eq.s32.totalorder %s33, 1
    %p303 = por %p301, %p302
    %p304 = scmp.ne.s32.totalorder %s295, %s296
    %p305 = scmp.eq.s32.totalorder %s33, 0
    %p306 = por %p304, %p305
    %p307 = scmp.ne.s32.totalorder %s295, %s296
    %p308 = scmp.eq.s32.totalorder %s34, 1
    %p309 = por %p307, %p308
    %p311 = scmp.ne.s32.totalorder %s296, %s310
    %p312 = scmp.eq.s32.totalorder %s34, 0
    %p313 = por %p311, %p312
    %s315 = sadd.s32 %s314, 1
    %p318 = scmp.eq.s32.totalorder %s28, 1
    %p319 = scmp.ne.s32.totalorder %s314, %s316
    %p320 = scmp.eq.s32.totalorder %s28, 0
    %p321 = por %p319, %p320
    %p322 = scmp.ne.s32.totalorder %s314, %s316
    %p323 = scmp.eq.s32.totalorder %s33, 1
    %p324 = por %p322, %p323
    %p325 = scmp.ne.s32.totalorder %s316, %s317
    %p326 = scmp.eq.s32.totalorder %s33, 0
    %p327 = por %p325, %p326
    %p328 = scmp.ne.s32.totalorder %s316, %s317
    %p329 = scmp.eq.s32.totalorder %s34, 1
    %p330 = por %p328, %p329
    %p332 = scmp.ne.s32.totalorder %s317, %s331
    %p333 = scmp.eq.s32.totalorder %s34, 0
    %p334 = por %p332, %p333
    %s336 = sadd.s32 %s335, 1
    %p339 = scmp.eq.s32.totalorder %s28, 1
    %p340 = scmp.ne.s32.totalorder %s335, %s337
    %p341 = scmp.eq.s32.totalorder %s28, 0
    %p342 = por %p340, %p341
    %p343 = scmp.ne.s32.totalorder %s335, %s337
    %p344 = scmp.eq.s32.totalorder %s33, 1
    %p345 = por %p343, %p344
    %p346 = scmp.ne.s32.totalorder %s337, %s338
    %p347 = scmp.eq.s32.totalorder %s33, 0
    %p348 = por %p346, %p347
    %p349 = scmp.ne.s32.totalorder %s337, %s338
    %p350 = scmp.eq.s32.totalorder %s34, 1
    %p351 = por %p349, %p350
    %p353 = scmp.ne.s32.totalorder %s338, %s352
    %p354 = scmp.eq.s32.totalorder %s34, 0
    %p355 = por %p353, %p354
    %s357 = sadd.s32 %s356, 1
    %p360 = scmp.eq.s32.totalorder %s28, 1
    %p361 = scmp.ne.s32.totalorder %s356, %s358
    %p362 = scmp.eq.s32.totalorder %s28, 0
    %p363 = por %p361, %p362
    %p364 = scmp.ne.s32.totalorder %s356, %s358
    %p365 = scmp.eq.s32.totalorder %s33, 1
    %p366 = por %p364, %p365
    %p367 = scmp.ne.s32.totalorder %s358, %s359
    %p368 = scmp.eq.s32.totalorder %s33, 0
    %p369 = por %p367, %p368
    %p370 = scmp.ne.s32.totalorder %s358, %s359
    %p371 = scmp.eq.s32.totalorder %s34, 1
    %p372 = por %p370, %p371
    %p374 = scmp.ne.s32.totalorder %s359, %s373
    %p375 = scmp.eq.s32.totalorder %s34, 0
    %p376 = por %p374, %p375
    %s378 = sadd.s32 %s377, 1
    %p381 = scmp.eq.s32.totalorder %s28, 1
    %p382 = scmp.ne.s32.totalorder %s377, %s379
    %p383 = scmp.eq.s32.totalorder %s28, 0
    %p384 = por %p382, %p383
    %p385 = scmp.ne.s32.totalorder %s377, %s379
    %p386 = scmp.eq.s32.totalorder %s33, 1
    %p387 = por %p385, %p386
    %p388 = scmp.ne.s32.totalorder %s379, %s380
    %p389 = scmp.eq.s32.totalorder %s33, 0
    %p390 = por %p388, %p389
    %p391 = scmp.ne.s32.totalorder %s379, %s380
    %p392 = scmp.eq.s32.totalorder %s34, 1
    %p393 = por %p391, %p392
    %p395 = scmp.ne.s32.totalorder %s380, %s394
    %p396 = scmp.eq.s32.totalorder %s34, 0
    %p397 = por %p395, %p396
    %s399 = sadd.s32 %s398, 1
    %p402 = scmp.eq.s32.totalorder %s28, 1
    %p403 = scmp.ne.s32.totalorder %s398, %s400
    %p404 = scmp.eq.s32.totalorder %s28, 0
    %p405 = por %p403, %p404
    %p406 = scmp.ne.s32.totalorder %s398, %s400
    %p407 = scmp.eq.s32.totalorder %s33, 1
    %p408 = por %p406, %p407
    %p409 = scmp.ne.s32.totalorder %s400, %s401
    %p410 = scmp.eq.s32.totalorder %s33, 0
    %p411 = por %p409, %p410
    %p412 = scmp.ne.s32.totalorder %s400, %s401
    %p413 = scmp.eq.s32.totalorder %s34, 1
    %p414 = por %p412, %p413
    %p416 = scmp.ne.s32.totalorder %s401, %s415
    %p417 = scmp.eq.s32.totalorder %s34, 0
    %p418 = por %p416, %p417
    %s420 = sadd.s32 %s419, 1
    %p423 = scmp.eq.s32.totalorder %s28, 1
    %p424 = scmp.ne.s32.totalorder %s419, %s421
    %p425 = scmp.eq.s32.totalorder %s28, 0
    %p426 = por %p424, %p425
    %p427 = scmp.ne.s32.totalorder %s419, %s421
    %p428 = scmp.eq.s32.totalorder %s33, 1
    %p429 = por %p427, %p428
    %p430 = scmp.ne.s32.totalorder %s421, %s422
    %p431 = scmp.eq.s32.totalorder %s33, 0
    %p432 = por %p430, %p431
    %p433 = scmp.ne.s32.totalorder %s421, %s422
    %p434 = scmp.eq.s32.totalorder %s34, 1
    %p435 = por %p433, %p434
    %p437 = scmp.ne.s32.totalorder %s422, %s436
    %p438 = scmp.eq.s32.totalorder %s34, 0
    %p439 = por %p437, %p438
    %s441 = sadd.s32 %s440, 1
    %p444 = scmp.eq.s32.totalorder %s28, 1
    %p445 = scmp.ne.s32.totalorder %s440, %s442
    %p446 = scmp.eq.s32.totalorder %s28, 0
    %p447 = por %p445, %p446
    %p448 = scmp.ne.s32.totalorder %s440, %s442
    %p449 = scmp.eq.s32.totalorder %s33, 1
    %p450 = por %p448, %p449
    %p451 = scmp.ne.s32.totalorder %s442, %s443
    %p452 = scmp.eq.s32.totalorder %s33, 0
    %p453 = por %p451, %p452
    %p454 = scmp.ne.s32.totalorder %s442, %s443
    %p455 = scmp.eq.s32.totalorder %s34, 1
    %p456 = por %p454, %p455
    %p458 = scmp.ne.s32.totalorder %s443, %s457
    %p459 = scmp.eq.s32.totalorder %s34, 0
    %p460 = por %p458, %p459
    %s462 = sadd.s32 %s461, 1
    %p465 = scmp.eq.s32.totalorder %s28, 1
    %p466 = scmp.ne.s32.totalorder %s461, %s463
    %p467 = scmp.eq.s32.totalorder %s28, 0
    %p468 = por %p466, %p467
    %p469 = scmp.ne.s32.totalorder %s461, %s463
    %p470 = scmp.eq.s32.totalorder %s33, 1
    %p471 = por %p469, %p470
    %p472 = scmp.ne.s32.totalorder %s463, %s464
    %p473 = scmp.eq.s32.totalorder %s33, 0
    %p474 = por %p472, %p473
    %p475 = scmp.ne.s32.totalorder %s463, %s464
    %p476 = scmp.eq.s32.totalorder %s34, 1
    %p477 = por %p475, %p476
    %p479 = scmp.ne.s32.totalorder %s464, %s478
    %p480 = scmp.eq.s32.totalorder %s34, 0
    %p481 = por %p479, %p480
    %s483 = sadd.s32 %s482, 1
    %p486 = scmp.eq.s32.totalorder %s28, 1
    %p487 = scmp.ne.s32.totalorder %s482, %s484
    %p488 = scmp.eq.s32.totalorder %s28, 0
    %p489 = por %p487, %p488
    %p490 = scmp.ne.s32.totalorder %s482, %s484
    %p491 = scmp.eq.s32.totalorder %s33, 1
    %p492 = por %p490, %p491
    %p493 = scmp.ne.s32.totalorder %s484, %s485
    %p494 = scmp.eq.s32.totalorder %s33, 0
    %p495 = por %p493, %p494
    %p496 = scmp.ne.s32.totalorder %s484, %s485
    %p497 = scmp.eq.s32.totalorder %s34, 1
    %p498 = por %p496, %p497
    %p500 = scmp.ne.s32.totalorder %s485, %s499
    %p501 = scmp.eq.s32.totalorder %s34, 0
    %p502 = por %p500, %p501
    %s503 = ssub.s32 %s28, %s35
    %p504 = scmp.eq.s32.totalorder %s503, 0
    %s506 = sadd.s32 %s505, 1
    %s507 = scalar_select %p504, %s505, %s506
    %p510 = pneg %p504
    %p511 = scmp.eq.s32.totalorder %s28, 1
    %p512 = por %p510, %p511
    %p513 = scmp.ne.s32.totalorder %s505, %s508
    %p514 = scmp.eq.s32.totalorder %s28, 0
    %p515 = por %p513, %p514
    %p516 = scmp.ne.s32.totalorder %s505, %s508
    %p517 = scmp.eq.s32.totalorder %s33, 1
    %p518 = por %p516, %p517
    %p519 = scmp.ne.s32.totalorder %s508, %s509
    %p520 = scmp.eq.s32.totalorder %s33, 0
    %p521 = por %p519, %p520
    %p522 = scmp.ne.s32.totalorder %s508, %s509
    %p523 = scmp.eq.s32.totalorder %s34, 1
    %p524 = por %p522, %p523
    %p526 = scmp.ne.s32.totalorder %s509, %s525
    %p527 = scmp.eq.s32.totalorder %s34, 0
    %p528 = por %p526, %p527
    %p529 = scmp.le.s32.totalorder 1, %s28
    %p530 = scmp.lt.s32.totalorder %s28, 3
    %p531 = pnand %p529, %p530
    %p532 = pneg %p531
    // Predicated region
    $region9: #{segmenter_forward.1} parent=5 // pred_check
      _
    $region10: #{segmenter_forward.1} parent=5 // pred_check_branch
      %534 = sbr.rel (%p531) target = $region12
    $region11: #{segmenter_forward.1} parent=5 // pred_region
      %s535 = ssub.s32 %s28, 1
      // Predicated region
      $region13: #{segmenter_forward.1} parent=11 // pred_check
        %p536 = pneg %p75
      $region14: #{segmenter_forward.1} parent=11 // pred_check_branch
        %538 = sbr.rel (%p536) target = $region16
      $region15: #{segmenter_forward.1} parent=11 // pred_region
        _
      $region16: #{segmenter_forward.1} parent=11 // pred_fallthru
        _
      // Predicated region
      $region17: #{segmenter_forward.1} parent=11 // pred_check
        %p539 = pneg %p96
      $region18: #{segmenter_forward.1} parent=11 // pred_check_branch
        %541 = sbr.rel (%p539) target = $region20
      $region19: #{segmenter_forward.1} parent=11 // pred_region
        _
      $region20: #{segmenter_forward.1} parent=11 // pred_fallthru
        _
      // Predicated region
      $region21: #{segmenter_forward.1} parent=11 // pred_check
        %p542 = pneg %p117
      $region22: #{segmenter_forward.1} parent=11 // pred_check_branch
        %544 = sbr.rel (%p542) target = $region24
      $region23: #{segmenter_forward.1} parent=11 // pred_region
        _
      $region24: #{segmenter_forward.1} parent=11 // pred_fallthru
        _
      // Predicated region
      $region25: #{segmenter_forward.1} parent=11 // pred_check
        %p545 = pneg %p138
      $region26: #{segmenter_forward.1} parent=11 // pred_check_branch
        %547 = sbr.rel (%p545) target = $region28
      $region27: #{segmenter_forward.1} parent=11 // pred_region
        _
      $region28: #{segmenter_forward.1} parent=11 // pred_fallthru
        _
      // Predicated region
      $region29: #{segmenter_forward.1} parent=11 // pred_check
        %p548 = pneg %p159
      $region30: #{segmenter_forward.1} parent=11 // pred_check_branch
        %550 = sbr.rel (%p548) target = $region32
      $region31: #{segmenter_forward.1} parent=11 // pred_region
        _
      $region32: #{segmenter_forward.1} parent=11 // pred_fallthru
        _
      // Predicated region
      $region33: #{segmenter_forward.1} parent=11 // pred_check
        %p551 = pneg %p180
      $region34: #{segmenter_forward.1} parent=11 // pred_check_branch
        %553 = sbr.rel (%p551) target = $region36
      $region35: #{segmenter_forward.1} parent=11 // pred_region
        _
      $region36: #{segmenter_forward.1} parent=11 // pred_fallthru
        _
      // Predicated region
      $region37: #{segmenter_forward.1} parent=11 // pred_check
        %p554 = pneg %p201
      $region38: #{segmenter_forward.1} parent=11 // pred_check_branch
        %556 = sbr.rel (%p554) target = $region40
      $region39: #{segmenter_forward.1} parent=11 // pred_region
        _
      $region40: #{segmenter_forward.1} parent=11 // pred_fallthru
        _
      // Predicated region
      $region41: #{segmenter_forward.1} parent=11 // pred_check
        %p557 = pneg %p222
      $region42: #{segmenter_forward.1} parent=11 // pred_check_branch
        %559 = sbr.rel (%p557) target = $region44
      $region43: #{segmenter_forward.1} parent=11 // pred_region
        _
      $region44: #{segmenter_forward.1} parent=11 // pred_fallthru
        _
      // Predicated region
      $region45: #{segmenter_forward.1} parent=11 // pred_check
        %p560 = pneg %p243
      $region46: #{segmenter_forward.1} parent=11 // pred_check_branch
        %562 = sbr.rel (%p560) target = $region48
      $region47: #{segmenter_forward.1} parent=11 // pred_region
        _
      $region48: #{segmenter_forward.1} parent=11 // pred_fallthru
        _
      // Predicated region
      $region49: #{segmenter_forward.1} parent=11 // pred_check
        %p563 = pneg %p264
      $region50: #{segmenter_forward.1} parent=11 // pred_check_branch
        %565 = sbr.rel (%p563) target = $region52
      $region51: #{segmenter_forward.1} parent=11 // pred_region
        _
      $region52: #{segmenter_forward.1} parent=11 // pred_fallthru
        _
      // Predicated region
      $region53: #{segmenter_forward.1} parent=11 // pred_check
        %p566 = pneg %p285
      $region54: #{segmenter_forward.1} parent=11 // pred_check_branch
        %568 = sbr.rel (%p566) target = $region56
      $region55: #{segmenter_forward.1} parent=11 // pred_region
        _
      $region56: #{segmenter_forward.1} parent=11 // pred_fallthru
        _
      // Predicated region
      $region57: #{segmenter_forward.1} parent=11 // pred_check
        %p569 = pneg %p306
      $region58: #{segmenter_forward.1} parent=11 // pred_check_branch
        %571 = sbr.rel (%p569) target = $region60
      $region59: #{segmenter_forward.1} parent=11 // pred_region
        _
      $region60: #{segmenter_forward.1} parent=11 // pred_fallthru
        _
      // Predicated region
      $region61: #{segmenter_forward.1} parent=11 // pred_check
        %p572 = pneg %p327
      $region62: #{segmenter_forward.1} parent=11 // pred_check_branch
        %574 = sbr.rel (%p572) target = $region64
      $region63: #{segmenter_forward.1} parent=11 // pred_region
        _
      $region64: #{segmenter_forward.1} parent=11 // pred_fallthru
        _
      // Predicated region
      $region65: #{segmenter_forward.1} parent=11 // pred_check
        %p575 = pneg %p348
      $region66: #{segmenter_forward.1} parent=11 // pred_check_branch
        %577 = sbr.rel (%p575) target = $region68
      $region67: #{segmenter_forward.1} parent=11 // pred_region
        _
      $region68: #{segmenter_forward.1} parent=11 // pred_fallthru
        _
      // Predicated region
      $region69: #{segmenter_forward.1} parent=11 // pred_check
        %p578 = pneg %p369
      $region70: #{segmenter_forward.1} parent=11 // pred_check_branch
        %580 = sbr.rel (%p578) target = $region72
      $region71: #{segmenter_forward.1} parent=11 // pred_region
        _
      $region72: #{segmenter_forward.1} parent=11 // pred_fallthru
        _
      // Predicated region
      $region73: #{segmenter_forward.1} parent=11 // pred_check
        %p581 = pneg %p390
      $region74: #{segmenter_forward.1} parent=11 // pred_check_branch
        %583 = sbr.rel (%p581) target = $region76
      $region75: #{segmenter_forward.1} parent=11 // pred_region
        _
      $region76: #{segmenter_forward.1} parent=11 // pred_fallthru
        _
      // Predicated region
      $region77: #{segmenter_forward.1} parent=11 // pred_check
        %p584 = pneg %p411
      $region78: #{segmenter_forward.1} parent=11 // pred_check_branch
        %586 = sbr.rel (%p584) target = $region80
      $region79: #{segmenter_forward.1} parent=11 // pred_region
        _
      $region80: #{segmenter_forward.1} parent=11 // pred_fallthru
        _
      // Predicated region
      $region81: #{segmenter_forward.1} parent=11 // pred_check
        %p587 = pneg %p432
      $region82: #{segmenter_forward.1} parent=11 // pred_check_branch
        %589 = sbr.rel (%p587) target = $region84
      $region83: #{segmenter_forward.1} parent=11 // pred_region
        _
      $region84: #{segmenter_forward.1} parent=11 // pred_fallthru
        _
      // Predicated region
      $region85: #{segmenter_forward.1} parent=11 // pred_check
        %p590 = pneg %p453
      $region86: #{segmenter_forward.1} parent=11 // pred_check_branch
        %592 = sbr.rel (%p590) target = $region88
      $region87: #{segmenter_forward.1} parent=11 // pred_region
        _
      $region88: #{segmenter_forward.1} parent=11 // pred_fallthru
        _
      // Predicated region
      $region89: #{segmenter_forward.1} parent=11 // pred_check
        %p593 = pneg %p474
      $region90: #{segmenter_forward.1} parent=11 // pred_check_branch
        %595 = sbr.rel (%p593) target = $region92
      $region91: #{segmenter_forward.1} parent=11 // pred_region
        _
      $region92: #{segmenter_forward.1} parent=11 // pred_fallthru
        _
      // Predicated region
      $region93: #{segmenter_forward.1} parent=11 // pred_check
        %p596 = pneg %p495
      $region94: #{segmenter_forward.1} parent=11 // pred_check_branch
        %598 = sbr.rel (%p596) target = $region96
      $region95: #{segmenter_forward.1} parent=11 // pred_region
        _
      $region96: #{segmenter_forward.1} parent=11 // pred_fallthru
        _
    $region12: #{segmenter_forward.1} parent=5 // pred_fallthru
      _
    %p599 = scmp.lt.s32.totalorder %s28, 2
    // Predicated region
    $region97: #{segmenter_forward.1} parent=5 // pred_check
      %p600 = pneg %p599
    $region98: #{segmenter_forward.1} parent=5 // pred_check_branch
      %602 = sbr.rel (%p600) target = $region100
    $region99: #{segmenter_forward.1} parent=5 // pred_region
      // Predicated region
      $region101: #{segmenter_forward.1} parent=99 // pred_check
        %p603 = pneg %p48
      $region102: #{segmenter_forward.1} parent=99 // pred_check_branch
        %605 = sbr.rel (%p603) target = $region104
      $region103: #{segmenter_forward.1} parent=99 // pred_region
        %p606 = scmp.lt.s32.totalorder %s28, 1
        %s607 = scalar_select %p606, %s28, 1
        %s608 = smul.addr %s607, 2
        %s609 = smul.addr %s608, 4
        %s610 = scalar_lea.vmem %s0, %s609
      $region104: #{segmenter_forward.1} parent=99 // pred_fallthru
        _
    $region100: #{segmenter_forward.1} parent=5 // pred_fallthru
      _
    %p611 = scmp.le.s32.totalorder 1, %s28
    %p612 = scmp.lt.s32.totalorder %s28, 3
    %p613 = pnand %p611, %p612
    %p614 = pneg %p613
    // Predicated region
    $region105: #{segmenter_forward.1} parent=5 // pred_check
      _
    $region106: #{segmenter_forward.1} parent=5 // pred_check_branch
      %616 = sbr.rel (%p613) target = $region108
    $region107: #{segmenter_forward.1} parent=5 // pred_region
      %s617 = ssub.s32 %s28, 1
      %p618 = scmp.lt.s32.totalorder %s33, 1
      %s619 = scalar_select %p618, %s33, 1
      %s620 = smul.addr %s619, 2
      %s621 = smul.addr %s620, 4
      %s622 = scalar_lea.vmem %s0, %s621
      %p623 = pneg %p54
      %p624 = pneg %p51
      %p625 = pneg %p75
      %p626 = pneg %p72
      %p627 = pneg %p96
      %p628 = pneg %p93
      %p629 = pneg %p117
      %p630 = pneg %p114
      %p631 = pneg %p138
      %p632 = pneg %p135
      %p633 = pneg %p159
      %p634 = pneg %p156
      %p635 = pneg %p180
      %p636 = pneg %p177
      %p637 = pneg %p201
      %p638 = pneg %p198
      %p639 = pneg %p222
      %p640 = pneg %p219
      %p641 = pneg %p243
      %p642 = pneg %p240
      %p643 = pneg %p264
      %p644 = pneg %p261
      %p645 = pneg %p285
      %p646 = pneg %p282
      %p647 = pneg %p306
      %p648 = pneg %p303
      %p649 = pneg %p327
      %p650 = pneg %p324
      %p651 = pneg %p348
      %p652 = pneg %p345
      %p653 = pneg %p369
      %p654 = pneg %p366
      %p655 = pneg %p390
      %p656 = pneg %p387
      %p657 = pneg %p411
      %p658 = pneg %p408
      %p659 = pneg %p432
      %p660 = pneg %p429
      %p661 = pneg %p453
      %p662 = pneg %p450
      %p663 = pneg %p474
      %p664 = pneg %p471
      %p665 = pneg %p495
      %p666 = pneg %p492
      %p667 = pneg %p521
      %p668 = pneg %p518
      %p669 = scmp.lt.s32.totalorder %s33, 1
      %s670 = scalar_select %p669, %s33, 1
      %s671 = smul.addr %s670, 2
      %s672 = smul.addr %s671, 4
      %s673 = scalar_lea.vmem %s22, %s672
      %p674 = scmp.lt.s32.totalorder %s33, 1
      %s675 = scalar_select %p674, %s33, 1
      %s676 = smul.addr %s675, 2
      %s677 = smul.addr %s676, 4
      %s678 = scalar_lea.vmem %s0, %s677
      %p679 = scmp.lt.s32.totalorder %s33, 1
      %s680 = scalar_select %p679, %s33, 1
      %s681 = smul.addr %s680, 2
      %s682 = smul.addr %s681, 4
      %s683 = scalar_lea.vmem %s22, %s682
      %v685 = vld [vmem:[%s678] sm:$0xff]
      %v687 = vcombine.high %v685, %v685
      %v689 = vpack.c.bf16 %v685, %v685
      %v690 = vpack.c.bf16 %v687, %v687
      %v691 = vld [vmem:[%s3] sm:$0xf]
      %v692 = vld [vmem:[%s3 + $0x4] sm:$0xf]
      %v693 = vld [vmem:[%s3 + $0x8] sm:$0xf]
      %v694 = vld [vmem:[%s3 + $0xc] sm:$0xf]
      %v695 = vld [vmem:[%s3 + $0x10] sm:$0xf]
      %v696 = vld [vmem:[%s3 + $0x14] sm:$0xf]
      %v697 = vld [vmem:[%s3 + $0x18] sm:$0xf]
      %v698 = vld [vmem:[%s3 + $0x1c] sm:$0xf]
      %v699 = vld [vmem:[%s3 + $0x20] sm:$0xf]
      %v700 = vld [vmem:[%s3 + $0x24] sm:$0xf]
      %v701 = vld [vmem:[%s3 + $0x28] sm:$0xf]
      %v702 = vld [vmem:[%s3 + $0x2c] sm:$0xf]
      %v703 = vld [vmem:[%s3 + $0x30] sm:$0xf]
      %v704 = vld [vmem:[%s3 + $0x34] sm:$0xf]
      %v705 = vld [vmem:[%s3 + $0x38] sm:$0xf]
      %v706 = vld [vmem:[%s3 + $0x3c] sm:$0xf]
      %v707 = vld [vmem:[%s3 + $0x40] sm:$0xf]
      %v708 = vld [vmem:[%s3 + $0x44] sm:$0xf]
      %v709 = vld [vmem:[%s3 + $0x48] sm:$0xf]
      %v710 = vld [vmem:[%s3 + $0x4c] sm:$0xf]
      %v711 = vld [vmem:[%s3 + $0x50] sm:$0xf]
      %v712 = vld [vmem:[%s3 + $0x54] sm:$0xf]
      %v713 = vld [vmem:[%s3 + $0x58] sm:$0xf]
      %v714 = vld [vmem:[%s3 + $0x5c] sm:$0xf]
      %v715 = vld [vmem:[%s4] sm:$0x1]
      %v717 = vlaneseq
      %v718 = vshrl.u32 %v717, 7
      %v719 = vsub.s32 0, %v718
      %v720 = vrot.slane %v715, %v719
      %v746 = vunpack.c.l.b16 %v691
      %v747 = vunpack.c.l.b16 %v692
      %v748 = vunpack.c.l.b16 %v693
      %v749 = vunpack.c.l.b16 %v694
      %v750 = vunpack.c.l.b16 %v695
      %v751 = vunpack.c.l.b16 %v696
      %v752 = vunpack.c.l.b16 %v697
      %v753 = vunpack.c.l.b16 %v698
      %v754 = vunpack.c.l.b16 %v699
      %v755 = vunpack.c.l.b16 %v700
      %v756 = vunpack.c.l.b16 %v701
      %v757 = vunpack.c.l.b16 %v702
      %v758 = vunpack.c.l.b16 %v703
      %v759 = vunpack.c.l.b16 %v704
      %v760 = vunpack.c.l.b16 %v705
      %v761 = vunpack.c.l.b16 %v706
      %v762 = vunpack.c.l.b16 %v707
      %v763 = vunpack.c.l.b16 %v708
      %v764 = vunpack.c.l.b16 %v709
      %v765 = vunpack.c.l.b16 %v710
      %v766 = vunpack.c.l.b16 %v711
      %v767 = vunpack.c.l.b16 %v712
      %v768 = vunpack.c.l.b16 %v713
      %v769 = vunpack.c.l.b16 %v714
      %v770 = vpack.c.b16 %v747, %v746
      %v771 = vpack.c.b16 %v749, %v748
      %v772 = vpack.c.b16 %v751, %v750
      %v773 = vpack.c.b16 %v753, %v752
      %v774 = vpack.c.b16 %v755, %v754
      %v775 = vpack.c.b16 %v757, %v756
      %v776 = vpack.c.b16 %v759, %v758
      %v777 = vpack.c.b16 %v761, %v760
      %v778 = vpack.c.b16 %v763, %v762
      %v779 = vpack.c.b16 %v765, %v764
      %v780 = vpack.c.b16 %v767, %v766
      %v781 = vpack.c.b16 %v769, %v768
      %vm794 = vcmask 523264
      %v796 = vsel %vm794, %v690, 0
      %798 = vmatprep.subr.bf16.mxu0 0
      %799 = vmatpush1.bf16.msra.mxu0 %v770
      %800 = vmatprep.subr.bf16.mxu0 0
      %801 = vmatpush1.bf16.msra.mxu0 %v771
      %802 = vmatprep.subr.bf16.mxu0 0
      %803 = vmatpush1.bf16.msra.mxu0 %v772
      %804 = vmatprep.subr.bf16.mxu0 0
      %805 = vmatpush1.bf16.msra.mxu0 %v773
      %806 = vmatprep.subr.bf16.mxu0 0
      %807 = vmatpush1.bf16.msra.mxu0 %v774
      %808 = vmatprep.subr.bf16.mxu0 0
      %809 = vmatpush1.bf16.msra.mxu0 %v775
      %810 = vmatprep.subr.bf16.mxu0 0
      %811 = vmatpush1.bf16.msra.mxu0 %v776
      %812 = vmatprep.subr.bf16.mxu0 0
      %813 = vmatpush1.bf16.msra.mxu0 %v777
      %814 = vmatprep.subr.bf16.mxu0 0
      %815 = vmatpush1.bf16.msra.mxu0 %v778
      %816 = vmatprep.subr.bf16.mxu0 0
      %817 = vmatpush1.bf16.msra.mxu0 %v779
      %818 = vmatprep.subr.bf16.mxu0 0
      %819 = vmatpush1.bf16.msra.mxu0 %v780
      %820 = vmatprep.subr.bf16.mxu0 0
      %821 = vmatpush1.bf16.msra.mxu0 %v781
      %822 = vmatprep.subr.bf16.mxu0 0
      %823 = vmatpush1.bf16.msra.mxu0 0
      %824 = vmatprep.subr.bf16.mxu0 0
      %825 = vmatpush1.bf16.msra.mxu0 0
      %826 = vmatprep.subr.bf16.mxu0 0
      %827 = vmatpush1.bf16.msra.mxu0 0
      %828 = vmatprep.subr.bf16.mxu0 0
      %829 = vmatpush1.bf16.msra.mxu0 0
      %830 = vmatprep.mubr.bf16.mxu0 %v796
      %831 = vmatmul.mubr.bf16.gmra.mrb[0].mxu0 %v689
      %v832 = vpop.f32.mrb[0].mxu0
      %v833 = vadd.f32 %v720, %v832
      %v834 = vpop.f32.mrb[0].mxu0
      %v835 = vpop.f32.mrb[0].mxu0
      %v836 = vpop.f32.mrb[0].mxu0
      %837 = vdwg.mxu0
      %v838 = vld [vmem:[%s1] sm:$0x1]
      %vm839 = vcmask 253952
      %840 = vst.msk [vmem:[#allocation2] sm:$0x1] %vm839, %v838
      %vm841 = vcmask 257024
      %842 = vst.msk [vmem:[#allocation2 + $0x1] sm:$0xf] %vm841, %v833
      %v843 = vld [vmem:[#allocation2] sm:$0x1f]
      %v844 = vld [vmem:[%s2] sm:$0x1f]
      %v845 = vadd.f32 %v843, %v844
      %vm846 = vcmask 258048
      %v847 = vsel %vm846, %v845, 0.0
      %848 = vadd.xlane.f32.xlu0 %v847
      %v849 = vpop.xlane.xlu0 %848
      %v850 = vrcp.pop 32.0
      %v851 = vmul.f32 %v849, %v850
      %v852 = vsub.f32 %v845, %v851
      %v853 = vmul.f32 %v852, %v852
      %v854 = vsel %vm846, %v853, 0.0
      %855 = vadd.xlane.f32.xlu0 %v854
      %v856 = vpop.xlane.xlu0 %855
      %v857 = vmul.f32 %v856, %v850
      %v858 = vadd.f32 %v857, 1e-06
      %v859 = vrsqrt.pop %v858
      %v860 = vmul.f32 %v852, %v859
      %v861 = vld [vmem:[%s5] sm:$0x1]
      %v863 = vlaneseq
      %v864 = vshrl.u32 %v863, 7
      %v865 = vsub.s32 0, %v864
      %v866 = vrot.slane %v861, %v865
      %v868 = vmul.f32 %v860, %v866
      %v869 = vld [vmem:[%s6] sm:$0x1]
      %v871 = vlaneseq
      %v872 = vshrl.u32 %v871, 7
      %v873 = vsub.s32 0, %v872
      %v874 = vrot.slane %v869, %v873
      %v876 = vadd.f32 %v868, %v874
      %v877 = vpack.c.bf16 %v876, %v876
      %v878 = vld [vmem:[%s7] sm:$0xf]
      %v879 = vld [vmem:[%s7 + $0x4] sm:$0xf]
      %v880 = vld [vmem:[%s7 + $0x8] sm:$0xf]
      %v881 = vld [vmem:[%s7 + $0xc] sm:$0xf]
      %v882 = vld [vmem:[%s8] sm:$0x1]
      %v884 = vlaneseq
      %v885 = vshrl.u32 %v884, 7
      %v886 = vsub.s32 0, %v885
      %v887 = vrot.slane %v882, %v886
      %v893 = vunpack.c.l.b16 %v878
      %v894 = vunpack.c.l.b16 %v879
      %v895 = vunpack.c.l.b16 %v880
      %v896 = vunpack.c.l.b16 %v881
      %v897 = vpack.c.b16 %v894, %v893
      %v898 = vpack.c.b16 %v896, %v895
      %vm901 = vcmask 261120
      %v903 = vsel %vm901, %v877, 0
      %905 = vmatprep.subr.bf16.mxu0 0
      %906 = vmatpush1.bf16.msra.mxu0 %v897
      %907 = vmatprep.subr.bf16.mxu0 0
      %908 = vmatpush1.bf16.msra.mxu0 %v898
      %909 = vmatprep.subr.bf16.mxu0 0
      %910 = vmatpush1.bf16.msra.mxu0 0
      %911 = vmatprep.subr.bf16.mxu0 0
      %912 = vmatpush1.bf16.msra.mxu0 0
      %913 = vmatprep.subr.bf16.mxu0 0
      %914 = vmatpush1.bf16.msra.mxu0 0
      %915 = vmatprep.subr.bf16.mxu0 0
      %916 = vmatpush1.bf16.msra.mxu0 0
      %917 = vmatprep.subr.bf16.mxu0 0
      %918 = vmatpush1.bf16.msra.mxu0 0
      %919 = vmatprep.subr.bf16.mxu0 0
      %920 = vmatpush1.bf16.msra.mxu0 0
      %921 = vmatprep.subr.bf16.mxu0 0
      %922 = vmatpush1.bf16.msra.mxu0 0
      %923 = vmatprep.subr.bf16.mxu0 0
      %924 = vmatpush1.bf16.msra.mxu0 0
      %925 = vmatprep.subr.bf16.mxu0 0
      %926 = vmatpush1.bf16.msra.mxu0 0
      %927 = vmatprep.subr.bf16.mxu0 0
      %928 = vmatpush1.bf16.msra.mxu0 0
      %929 = vmatprep.subr.bf16.mxu0 0
      %930 = vmatpush1.bf16.msra.mxu0 0
      %931 = vmatprep.subr.bf16.mxu0 0
      %932 = vmatpush1.bf16.msra.mxu0 0
      %933 = vmatprep.subr.bf16.mxu0 0
      %934 = vmatpush1.bf16.msra.mxu0 0
      %935 = vmatprep.subr.bf16.mxu0 0
      %936 = vmatpush1.bf16.msra.mxu0 0
      %937 = vmatprep.mubr.bf16.mxu0 0
      %938 = vmatmul.mubr.bf16.gmra.mrb[0].mxu0 %v903
      %v939 = vpop.f32.mrb[0].mxu0
      %v940 = vadd.f32 %v887, %v939
      %v941 = vpop.f32.mrb[0].mxu0
      %v942 = vpop.f32.mrb[0].mxu0
      %v943 = vpop.f32.mrb[0].mxu0
      %944 = vdwg.mxu0
      %v945 = vpack.c.bf16 %v940, %v940
      %947 = vrot.lane.b32.xlu0 %v945, 96
      %v948 = vpop.permute.xlu0 %947
      %vm949 = vcmask 130048
      %v951 = vsel %vm949, %v945, 0
      %v954 = vsel %vm949, %v948, 0
      %956 = vmatprep.subr.bf16.mxu0 0
      %957 = vmatpush1.bf16.xpose.msra.mxu0 %v954
      %958 = vmatprep.subr.bf16.mxu0 0
      %959 = vmatpush1.bf16.xpose.msra.mxu0 0
      %960 = vmatprep.subr.bf16.mxu0 0
      %961 = vmatpush1.bf16.xpose.msra.mxu0 0
      %962 = vmatprep.subr.bf16.mxu0 0
      %963 = vmatpush1.bf16.xpose.msra.mxu0 0
      %964 = vmatprep.subr.bf16.mxu0 0
      %965 = vmatpush1.bf16.xpose.msra.mxu0 0
      %966 = vmatprep.subr.bf16.mxu0 0
      %967 = vmatpush1.bf16.xpose.msra.mxu0 0
      %968 = vmatprep.subr.bf16.mxu0 0
      %969 = vmatpush1.bf16.xpose.msra.mxu0 0
      %970 = vmatprep.subr.bf16.mxu0 0
      %971 = vmatpush1.bf16.xpose.msra.mxu0 0
      %972 = vmatprep.subr.bf16.mxu0 0
      %973 = vmatpush1.bf16.xpose.msra.mxu0 0
      %974 = vmatprep.subr.bf16.mxu0 0
      %975 = vmatpush1.bf16.xpose.msra.mxu0 0
      %976 = vmatprep.subr.bf16.mxu0 0
      %977 = vmatpush1.bf16.xpose.msra.mxu0 0
      %978 = vmatprep.subr.bf16.mxu0 0
      %979 = vmatpush1.bf16.xpose.msra.mxu0 0
      %980 = vmatprep.subr.bf16.mxu0 0
      %981 = vmatpush1.bf16.xpose.msra.mxu0 0
      %982 = vmatprep.subr.bf16.mxu0 0
      %983 = vmatpush1.bf16.xpose.msra.mxu0 0
      %984 = vmatprep.subr.bf16.mxu0 0
      %985 = vmatpush1.bf16.xpose.msra.mxu0 0
      %986 = vmatprep.subr.bf16.mxu0 0
      %987 = vmatpush1.bf16.xpose.msra.mxu0 0
      %988 = vmatprep.mubr.bf16.mxu0 0
      %989 = vmatmul.mubr.bf16.gmra.mrb[0].mxu0 %v951
      %v990 = vpop.f32.mrb[0].mxu0
      %v991 = vadd.f32 0.0, %v990
      %v992 = vpop.f32.mrb[0].mxu0
      %v993 = vpop.f32.mrb[0].mxu0
      %v994 = vpop.f32.mrb[0].mxu0
      %995 = vdwg.mxu0
      %v996 = vmul.f32 %v991, 0.25
      %vm997 = vcmask 36864
      %v998 = vsel %vm997, %v996, -inf
      %999 = vmax.xlane.f32.xlu0 %v998
      %v1000 = vpop.xlane.xlu0 %999
      %v1001 = vsub.f32 %v996, %v1000
      %v1002 = vmul.f32 %v1001, 1.442695
      %v1003 = vpow.pop %v1002
      %v1004 = vsel %vm997, %v1003, 0.0
      %1005 = vadd.xlane.f32.xlu0 %v1004
      %v1006 = vpop.xlane.xlu0 %1005
      %v1007 = vrcp.pop %v1006
      %v1008 = vmul.f32 %v1003, %v1007
      %v1009 = vpack.c.bf16 %v1008, %v1008
      %1010 = vrot.lane.b32.xlu0 %v945, 64
      %v1011 = vpop.permute.xlu0 %1010
      %vm1012 = vcmask 39936
      %v1014 = vsel %vm1012, %v1009, 0
      %vm1016 = vcmask 1041408
      %vm1017 = vcmask 1042432
      %v1018 = vsel %vm1016, 4294967295, 65535
      %v1019 = vsel %vm1017, %v1018, 0
      %v1021 = vand.u32 %v1011, %v1019
      %1023 = vmatprep.subr.bf16.mxu0 0
      %1024 = vmatpush1.bf16.msra.mxu0 %v1021
      %1025 = vmatprep.subr.bf16.mxu0 0
      %1026 = vmatpush1.bf16.msra.mxu0 0
      %1027 = vmatprep.subr.bf16.mxu0 0
      %1028 = vmatpush1.bf16.msra.mxu0 0
      %1029 = vmatprep.subr.bf16.mxu0 0
      %1030 = vmatpush1.bf16.msra.mxu0 0
      %1031 = vmatprep.subr.bf16.mxu0 0
      %1032 = vmatpush1.bf16.msra.mxu0 0
      %1033 = vmatprep.subr.bf16.mxu0 0
      %1034 = vmatpush1.bf16.msra.mxu0 0
      %1035 = vmatprep.subr.bf16.mxu0 0
      %1036 = vmatpush1.bf16.msra.mxu0 0
      %1037 = vmatprep.subr.bf16.mxu0 0
      %1038 = vmatpush1.bf16.msra.mxu0 0
      %1039 = vmatprep.subr.bf16.mxu0 0
      %1040 = vmatpush1.bf16.msra.mxu0 0
      %1041 = vmatprep.subr.bf16.mxu0 0
      %1042 = vmatpush1.bf16.msra.mxu0 0
      %1043 = vmatprep.subr.bf16.mxu0 0
      %1044 = vmatpush1.bf16.msra.mxu0 0
      %1045 = vmatprep.subr.bf16.mxu0 0
      %1046 = vmatpush1.bf16.msra.mxu0 0
      %1047 = vmatprep.subr.bf16.mxu0 0
      %1048 = vmatpush1.bf16.msra.mxu0 0
      %1049 = vmatprep.subr.bf16.mxu0 0
      %1050 = vmatpush1.bf16.msra.mxu0 0
      %1051 = vmatprep.subr.bf16.mxu0 0
      %1052 = vmatpush1.bf16.msra.mxu0 0
      %1053 = vmatprep.subr.bf16.mxu0 0
      %1054 = vmatpush1.bf16.msra.mxu0 0
      %1055 = vmatprep.mubr.bf16.mxu0 0
      %1056 = vmatmul.mubr.bf16.gmra.mrb[0].mxu0 %v1014
      %v1057 = vpop.f32.mrb[0].mxu0
      %v1058 = vadd.f32 0.0, %v1057
      %v1059 = vpop.f32.mrb[0].mxu0
      %v1060 = vpop.f32.mrb[0].mxu0
      %v1061 = vpop.f32.mrb[0].mxu0
      %1062 = vdwg.mxu0
      %vm1063 = vcmask 126976
      %1064 = vst.msk [vmem:[#allocation3] sm:$0x1f] %vm1063, %v1058
      %1065 = vrot.lane.b32.xlu0 %v945, 112
      %v1066 = vpop.permute.xlu0 %1065
      %1067 = vrot.lane.b32.xlu0 %v945, 80
      %v1068 = vpop.permute.xlu0 %1067
      %v1070 = vsel %vm949, %v1066, 0
      %v1073 = vsel %vm949, %v1068, 0
      %1075 = vmatprep.subr.bf16.mxu0 0
      %1076 = vmatpush1.bf16.xpose.msra.mxu0 %v1073
      %1077 = vmatprep.subr.bf16.mxu0 0
      %1078 = vmatpush1.bf16.xpose.msra.mxu0 0
      %1079 = vmatprep.subr.bf16.mxu0 0
      %1080 = vmatpush1.bf16.xpose.msra.mxu0 0
      %1081 = vmatprep.subr.bf16.mxu0 0
      %1082 = vmatpush1.bf16.xpose.msra.mxu0 0
      %1083 = vmatprep.subr.bf16.mxu0 0
      %1084 = vmatpush1.bf16.xpose.msra.mxu0 0
      %1085 = vmatprep.subr.bf16.mxu0 0
      %1086 = vmatpush1.bf16.xpose.msra.mxu0 0
      %1087 = vmatprep.subr.bf16.mxu0 0
      %1088 = vmatpush1.bf16.xpose.msra.mxu0 0
      %1089 = vmatprep.subr.bf16.mxu0 0
      %1090 = vmatpush1.bf16.xpose.msra.mxu0 0
      %1091 = vmatprep.subr.bf16.mxu0 0
      %1092 = vmatpush1.bf16.xpose.msra.mxu0 0
      %1093 = vmatprep.subr.bf16.mxu0 0
      %1094 = vmatpush1.bf16.xpose.msra.mxu0 0
      %1095 = vmatprep.subr.bf16.mxu0 0
      %1096 = vmatpush1.bf16.xpose.msra.mxu0 0
      %1097 = vmatprep.subr.bf16.mxu0 0
      %1098 = vmatpush1.bf16.xpose.msra.mxu0 0
      %1099 = vmatprep.subr.bf16.mxu0 0
      %1100 = vmatpush1.bf16.xpose.msra.mxu0 0
      %1101 = vmatprep.subr.bf16.mxu0 0
      %1102 = vmatpush1.bf16.xpose.msra.mxu0 0
      %1103 = vmatprep.subr.bf16.mxu0 0
      %1104 = vmatpush1.bf16.xpose.msra.mxu0 0
      %1105 = vmatprep.subr.bf16.mxu0 0
      %1106 = vmatpush1.bf16.xpose.msra.mxu0 0
      %1107 = vmatprep.mubr.bf16.mxu0 0
      %1108 = vmatmul.mubr.bf16.gmra.mrb[0].mxu0 %v1070
      %v1109 = vpop.f32.mrb[0].mxu0
      %v1110 = vadd.f32 0.0, %v1109
      %v1111 = vpop.f32.mrb[0].mxu0
      %v1112 = vpop.f32.mrb[0].mxu0
      %v1113 = vpop.f32.mrb[0].mxu0
      %1114 = vdwg.mxu0
      %v1115 = vmul.f32 %v1110, 0.25
      %v1116 = vsel %vm997, %v1115, -inf
      %1117 = vmax.xlane.f32.xlu0 %v1116
      %v1118 = vpop.xlane.xlu0 %1117
      %v1119 = vsub.f32 %v1115, %v1118
      %v1120 = vmul.f32 %v1119, 1.442695
      %v1121 = vpow.pop %v1120
      %v1122 = vsel %vm997, %v1121, 0.0
      %1123 = vadd.xlane.f32.xlu0 %v1122
      %v1124 = vpop.xlane.xlu0 %1123
      %v1125 = vrcp.pop %v1124
      %v1126 = vmul.f32 %v1121, %v1125
      %v1127 = vpack.c.bf16 %v1126, %v1126
      %1128 = vrot.lane.b32.xlu0 %v945, 48
      %v1129 = vpop.permute.xlu0 %1128
      %v1131 = vsel %vm1012, %v1127, 0
      %v1134 = vand.u32 %v1129, %v1019
      %1136 = vmatprep.subr.bf16.mxu0 0
      %1137 = vmatpush1.bf16.msra.mxu0 %v1134
      %1138 = vmatprep.subr.bf16.mxu0 0
      %1139 = vmatpush1.bf16.msra.mxu0 0
      %1140 = vmatprep.subr.bf16.mxu0 0
      %1141 = vmatpush1.bf16.msra.mxu0 0
      %1142 = vmatprep.subr.bf16.mxu0 0
      %1143 = vmatpush1.bf16.msra.mxu0 0
      %1144 = vmatprep.subr.bf16.mxu0 0
      %1145 = vmatpush1.bf16.msra.mxu0 0
      %1146 = vmatprep.subr.bf16.mxu0 0
      %1147 = vmatpush1.bf16.msra.mxu0 0
      %1148 = vmatprep.subr.bf16.mxu0 0
      %1149 = vmatpush1.bf16.msra.mxu0 0
      %1150 = vmatprep.subr.bf16.mxu0 0
      %1151 = vmatpush1.bf16.msra.mxu0 0
      %1152 = vmatprep.subr.bf16.mxu0 0
      %1153 = vmatpush1.bf16.msra.mxu0 0
      %1154 = vmatprep.subr.bf16.mxu0 0
      %1155 = vmatpush1.bf16.msra.mxu0 0
      %1156 = vmatprep.subr.bf16.mxu0 0
      %1157 = vmatpush1.bf16.msra.mxu0 0
      %1158 = vmatprep.subr.bf16.mxu0 0
      %1159 = vmatpush1.bf16.msra.mxu0 0
      %1160 = vmatprep.subr.bf16.mxu0 0
      %1161 = vmatpush1.bf16.msra.mxu0 0
      %1162 = vmatprep.subr.bf16.mxu0 0
      %1163 = vmatpush1.bf16.msra.mxu0 0
      %1164 = vmatprep.subr.bf16.mxu0 0
      %1165 = vmatpush1.bf16.msra.mxu0 0
      %1166 = vmatprep.subr.bf16.mxu0 0
      %1167 = vmatpush1.bf16.msra.mxu0 0
      %1168 = vmatprep.mubr.bf16.mxu0 0
      %1169 = vmatmul.mubr.bf16.gmra.mrb[0].mxu0 %v1131
      %v1170 = vpop.f32.mrb[0].mxu0
      %v1171 = vadd.f32 0.0, %v1170
      %v1172 = vpop.f32.mrb[0].mxu0
      %v1173 = vpop.f32.mrb[0].mxu0
      %v1174 = vpop.f32.mrb[0].mxu0
      %1175 = vdwg.mxu0
      %1177 = vrot.lane.b32.xlu0 %v1171, 16
      %v1178 = vpop.permute.xlu0 %1177
      %vm1180 = vcmask 258176
      %1181 = vst.msk [vmem:[#allocation3] sm:$0x1f] %vm1180, %v1178
      %v1182 = vld [vmem:[#allocation3] sm:$0x1f]
      %v1183 = vpack.c.bf16 %v1182, %v1182
      %v1184 = vld [vmem:[%s9] sm:$0xf]
      %v1185 = vld [vmem:[%s9 + $0x4] sm:$0xf]
      %v1186 = vld [vmem:[%s9 + $0x8] sm:$0xf]
      %v1187 = vld [vmem:[%s9 + $0xc] sm:$0xf]
      %v1188 = vld [vmem:[%s10] sm:$0x1]
      %v1190 = vlaneseq
      %v1191 = vshrl.u32 %v1190, 7
      %v1192 = vsub.s32 0, %v1191
      %v1193 = vrot.slane %v1188, %v1192
      %v1199 = vunpack.c.l.b16 %v1184
      %v1200 = vunpack.c.l.b16 %v1185
      %v1201 = vunpack.c.l.b16 %v1186
      %v1202 = vunpack.c.l.b16 %v1187
      %v1203 = vpack.c.b16 %v1200, %v1199
      %v1204 = vpack.c.b16 %v1202, %v1201
      %v1208 = vsel %vm901, %v1183, 0
      %1210 = vmatprep.subr.bf16.mxu0 0
      %1211 = vmatpush1.bf16.msra.mxu0 %v1203
      %1212 = vmatprep.subr.bf16.mxu0 0
      %1213 = vmatpush1.bf16.msra.mxu0 %v1204
      %1214 = vmatprep.subr.bf16.mxu0 0
      %1215 = vmatpush1.bf16.msra.mxu0 0
      %1216 = vmatprep.subr.bf16.mxu0 0
      %1217 = vmatpush1.bf16.msra.mxu0 0
      %1218 = vmatprep.subr.bf16.mxu0 0
      %1219 = vmatpush1.bf16.msra.mxu0 0
      %1220 = vmatprep.subr.bf16.mxu0 0
      %1221 = vmatpush1.bf16.msra.mxu0 0
      %1222 = vmatprep.subr.bf16.mxu0 0
      %1223 = vmatpush1.bf16.msra.mxu0 0
      %1224 = vmatprep.subr.bf16.mxu0 0
      %1225 = vmatpush1.bf16.msra.mxu0 0
      %1226 = vmatprep.subr.bf16.mxu0 0
      %1227 = vmatpush1.bf16.msra.mxu0 0
      %1228 = vmatprep.subr.bf16.mxu0 0
      %1229 = vmatpush1.bf16.msra.mxu0 0
      %1230 = vmatprep.subr.bf16.mxu0 0
      %1231 = vmatpush1.bf16.msra.mxu0 0
      %1232 = vmatprep.subr.bf16.mxu0 0
      %1233 = vmatpush1.bf16.msra.mxu0 0
      %1234 = vmatprep.subr.bf16.mxu0 0
      %1235 = vmatpush1.bf16.msra.mxu0 0
      %1236 = vmatprep.subr.bf16.mxu0 0
      %1237 = vmatpush1.bf16.msra.mxu0 0
      %1238 = vmatprep.subr.bf16.mxu0 0
      %1239 = vmatpush1.bf16.msra.mxu0 0
      %1240 = vmatprep.subr.bf16.mxu0 0
      %1241 = vmatpush1.bf16.msra.mxu0 0
      %1242 = vmatprep.mubr.bf16.mxu0 0
      %1243 = vmatmul.mubr.bf16.gmra.mrb[0].mxu0 %v1208
      %v1244 = vpop.f32.mrb[0].mxu0
      %v1245 = vadd.f32 %v1193, %v1244
      %v1246 = vpop.f32.mrb[0].mxu0
      %v1247 = vpop.f32.mrb[0].mxu0
      %v1248 = vpop.f32.mrb[0].mxu0
      %1249 = vdwg.mxu0
      %v1250 = vadd.f32 %v845, %v1245
      %v1251 = vsel %vm846, %v1250, 0.0
      %1252 = vadd.xlane.f32.xlu0 %v1251
      %v1253 = vpop.xlane.xlu0 %1252
      %v1254 = vmul.f32 %v1253, %v850
      %v1255 = vsub.f32 %v1250, %v1254
      %v1256 = vmul.f32 %v1255, %v1255
      %v1257 = vsel %vm846, %v1256, 0.0
      %1258 = vadd.xlane.f32.xlu0 %v1257
      %v1259 = vpop.xlane.xlu0 %1258
      %v1260 = vmul.f32 %v1259, %v850
      %v1261 = vadd.f32 %v1260, 1e-06
      %v1262 = vrsqrt.pop %v1261
      %v1263 = vmul.f32 %v1255, %v1262
      %v1264 = vld [vmem:[%s11] sm:$0x1]
      %v1266 = vlaneseq
      %v1267 = vshrl.u32 %v1266, 7
      %v1268 = vsub.s32 0, %v1267
      %v1269 = vrot.slane %v1264, %v1268
      %v1271 = vmul.f32 %v1263, %v1269
      %v1272 = vld [vmem:[%s12] sm:$0x1]
      %v1274 = vlaneseq
      %v1275 = vshrl.u32 %v1274, 7
      %v1276 = vsub.s32 0, %v1275
      %v1277 = vrot.slane %v1272, %v1276
      %v1279 = vadd.f32 %v1271, %v1277
      %v1280 = vpack.c.bf16 %v1279, %v1279
      %v1281 = vld [vmem:[%s13] sm:$0xf]
      %v1282 = vld [vmem:[%s13 + $0x4] sm:$0xf]
      %v1283 = vld [vmem:[%s13 + $0x8] sm:$0xf]
      %v1284 = vld [vmem:[%s13 + $0xc] sm:$0xf]
      %v1285 = vld [vmem:[%s14] sm:$0x1]
      %v1287 = vlaneseq
      %v1288 = vshrl.u32 %v1287, 7
      %v1289 = vsub.s32 0, %v1288
      %v1290 = vrot.slane %v1285, %v1289
      %v1296 = vunpack.c.l.b16 %v1281
      %v1297 = vunpack.c.l.b16 %v1282
      %v1298 = vunpack.c.l.b16 %v1283
      %v1299 = vunpack.c.l.b16 %v1284
      %v1300 = vpack.c.b16 %v1297, %v1296
      %v1301 = vpack.c.b16 %v1299, %v1298
      %v1305 = vsel %vm901, %v1280, 0
      %1307 = vmatprep.subr.bf16.mxu0 0
      %1308 = vmatpush1.bf16.msra.mxu0 %v1300
      %1309 = vmatprep.subr.bf16.mxu0 0
      %1310 = vmatpush1.bf16.msra.mxu0 %v1301
      %1311 = vmatprep.subr.bf16.mxu0 0
      %1312 = vmatpush1.bf16.msra.mxu0 0
      %1313 = vmatprep.subr.bf16.mxu0 0
      %1314 = vmatpush1.bf16.msra.mxu0 0
      %1315 = vmatprep.subr.bf16.mxu0 0
      %1316 = vmatpush1.bf16.msra.mxu0 0
      %1317 = vmatprep.subr.bf16.mxu0 0
      %1318 = vmatpush1.bf16.msra.mxu0 0
      %1319 = vmatprep.subr.bf16.mxu0 0
      %1320 = vmatpush1.bf16.msra.mxu0 0
      %1321 = vmatprep.subr.bf16.mxu0 0
      %1322 = vmatpush1.bf16.msra.mxu0 0
      %1323 = vmatprep.subr.bf16.mxu0 0
      %1324 = vmatpush1.bf16.msra.mxu0 0
      %1325 = vmatprep.subr.bf16.mxu0 0
      %1326 = vmatpush1.bf16.msra.mxu0 0
      %1327 = vmatprep.subr.bf16.mxu0 0
      %1328 = vmatpush1.bf16.msra.mxu0 0
      %1329 = vmatprep.subr.bf16.mxu0 0
      %1330 = vmatpush1.bf16.msra.mxu0 0
      %1331 = vmatprep.subr.bf16.mxu0 0
      %1332 = vmatpush1.bf16.msra.mxu0 0
      %1333 = vmatprep.subr.bf16.mxu0 0
      %1334 = vmatpush1.bf16.msra.mxu0 0
      %1335 = vmatprep.subr.bf16.mxu0 0
      %1336 = vmatpush1.bf16.msra.mxu0 0
      %1337 = vmatprep.subr.bf16.mxu0 0
      %1338 = vmatpush1.bf16.msra.mxu0 0
      %1339 = vmatprep.mubr.bf16.mxu0 0
      %1340 = vmatmul.mubr.bf16.gmra.mrb[0].mxu0 %v1305
      %v1341 = vpop.f32.mrb[0].mxu0
      %v1342 = vadd.f32 %v1290, %v1341
      %v1343 = vpop.f32.mrb[0].mxu0
      %v1344 = vpop.f32.mrb[0].mxu0
      %v1345 = vpop.f32.mrb[0].mxu0
      %1346 = vdwg.mxu0
      %v1347 = vmul.f32 %v1342, %v1342
      %v1348 = vmul.f32 %v1342, %v1347
      %v1349 = vmul.f32 %v1348, 0.044715
      %v1350 = vadd.f32 %v1342, %v1349
      %v1351 = vmul.f32 %v1350, 0.7978846
      %v1352 = vtanh.pop %v1351
      %v1353 = vadd.f32 %v1352, 1.0
      %v1354 = vmul.f32 %v1353, 0.5
      %v1355 = vmul.f32 %v1342, %v1354
      %v1356 = vpack.c.bf16 %v1355, %v1355
      %v1357 = vld [vmem:[%s15] sm:$0xf]
      %v1358 = vld [vmem:[%s15 + $0x4] sm:$0xf]
      %v1359 = vld [vmem:[%s15 + $0x8] sm:$0xf]
      %v1360 = vld [vmem:[%s15 + $0xc] sm:$0xf]
      %v1361 = vld [vmem:[%s15 + $0x10] sm:$0xf]
      %v1362 = vld [vmem:[%s15 + $0x14] sm:$0xf]
      %v1363 = vld [vmem:[%s15 + $0x18] sm:$0xf]
      %v1364 = vld [vmem:[%s15 + $0x1c] sm:$0xf]
      %v1365 = vld [vmem:[%s16] sm:$0x1]
      %v1367 = vlaneseq
      %v1368 = vshrl.u32 %v1367, 7
      %v1369 = vsub.s32 0, %v1368
      %v1370 = vrot.slane %v1365, %v1369
      %v1380 = vunpack.c.l.b16 %v1357
      %v1381 = vunpack.c.l.b16 %v1358
      %v1382 = vunpack.c.l.b16 %v1359
      %v1383 = vunpack.c.l.b16 %v1360
      %v1384 = vunpack.c.l.b16 %v1361
      %v1385 = vunpack.c.l.b16 %v1362
      %v1386 = vunpack.c.l.b16 %v1363
      %v1387 = vunpack.c.l.b16 %v1364
      %v1388 = vpack.c.b16 %v1381, %v1380
      %v1389 = vpack.c.b16 %v1383, %v1382
      %v1390 = vpack.c.b16 %v1385, %v1384
      %v1391 = vpack.c.b16 %v1387, %v1386
      %v1397 = vsel %vm794, %v1356, 0
      %1399 = vmatprep.subr.bf16.mxu0 0
      %1400 = vmatpush1.bf16.msra.mxu0 %v1388
      %1401 = vmatprep.subr.bf16.mxu0 0
      %1402 = vmatpush1.bf16.msra.mxu0 %v1389
      %1403 = vmatprep.subr.bf16.mxu0 0
      %1404 = vmatpush1.bf16.msra.mxu0 %v1390
      %1405 = vmatprep.subr.bf16.mxu0 0
      %1406 = vmatpush1.bf16.msra.mxu0 %v1391
      %1407 = vmatprep.subr.bf16.mxu0 0
      %1408 = vmatpush1.bf16.msra.mxu0 0
      %1409 = vmatprep.subr.bf16.mxu0 0
      %1410 = vmatpush1.bf16.msra.mxu0 0
      %1411 = vmatprep.subr.bf16.mxu0 0
      %1412 = vmatpush1.bf16.msra.mxu0 0
      %1413 = vmatprep.subr.bf16.mxu0 0
      %1414 = vmatpush1.bf16.msra.mxu0 0
      %1415 = vmatprep.subr.bf16.mxu0 0
      %1416 = vmatpush1.bf16.msra.mxu0 0
      %1417 = vmatprep.subr.bf16.mxu0 0
      %1418 = vmatpush1.bf16.msra.mxu0 0
      %1419 = vmatprep.subr.bf16.mxu0 0
      %1420 = vmatpush1.bf16.msra.mxu0 0
      %1421 = vmatprep.subr.bf16.mxu0 0
      %1422 = vmatpush1.bf16.msra.mxu0 0
      %1423 = vmatprep.subr.bf16.mxu0 0
      %1424 = vmatpush1.bf16.msra.mxu0 0
      %1425 = vmatprep.subr.bf16.mxu0 0
      %1426 = vmatpush1.bf16.msra.mxu0 0
      %1427 = vmatprep.subr.bf16.mxu0 0
      %1428 = vmatpush1.bf16.msra.mxu0 0
      %1429 = vmatprep.subr.bf16.mxu0 0
      %1430 = vmatpush1.bf16.msra.mxu0 0
      %1431 = vmatprep.mubr.bf16.mxu0 0
      %1432 = vmatmul.mubr.bf16.gmra.mrb[0].mxu0 %v1397
      %v1433 = vpop.f32.mrb[0].mxu0
      %v1434 = vadd.f32 %v1370, %v1433
      %v1435 = vpop.f32.mrb[0].mxu0
      %v1436 = vpop.f32.mrb[0].mxu0
      %v1437 = vpop.f32.mrb[0].mxu0
      %1438 = vdwg.mxu0
      %v1439 = vadd.f32 %v1250, %v1434
      %v1440 = vsel %vm846, %v1439, 0.0
      %1441 = vadd.xlane.f32.xlu0 %v1440
      %v1442 = vpop.xlane.xlu0 %1441
      %v1443 = vmul.f32 %v1442, %v850
      %v1444 = vsub.f32 %v1439, %v1443
      %v1445 = vmul.f32 %v1444, %v1444
      %v1446 = vsel %vm846, %v1445, 0.0
      %1447 = vadd.xlane.f32.xlu0 %v1446
      %v1448 = vpop.xlane.xlu0 %1447
      %v1449 = vmul.f32 %v1448, %v850
      %v1450 = vadd.f32 %v1449, 1e-06
      %v1451 = vrsqrt.pop %v1450
      %v1452 = vmul.f32 %v1444, %v1451
      %v1453 = vld [vmem:[%s17] sm:$0x1]
      %v1455 = vlaneseq
      %v1456 = vshrl.u32 %v1455, 7
      %v1457 = vsub.s32 0, %v1456
      %v1458 = vrot.slane %v1453, %v1457
      %v1460 = vmul.f32 %v1452, %v1458
      %v1461 = vld [vmem:[%s18] sm:$0x1]
      %v1463 = vlaneseq
      %v1464 = vshrl.u32 %v1463, 7
      %v1465 = vsub.s32 0, %v1464
      %v1466 = vrot.slane %v1461, %v1465
      %v1468 = vadd.f32 %v1460, %v1466
      %v1469 = vld [vmem:[%s19] sm:$0xf]
      %v1470 = vld [vmem:[%s20] sm:$0xf]
      %1472 = vset.pattern.permute.xlu0 0
      %1473 = vperm.xlu0 %1472, %v1470
      %v1474 = vpop.permute.xlu0 %1473
      %v1477 = vrot.slane %v1468, 1
      %v1479 = vsel %vm901, %v1469, 0
      %v1481 = vsel %vm901, %v1477, 0
      %1483 = vmatprep.subr.mxu0 0.0
      %1484 = vmatpush1.xpose.msra.mxu0 %v1481
      %1485 = vmatprep.subr.mxu0 0.0
      %1486 = vmatpush1.xpose.msra.mxu0 0.0
      %1487 = vmatprep.subr.mxu0 0.0
      %1488 = vmatpush1.xpose.msra.mxu0 0.0
      %1489 = vmatprep.subr.mxu0 0.0
      %1490 = vmatpush1.xpose.msra.mxu0 0.0
      %1491 = vmatprep.subr.mxu0 0.0
      %1492 = vmatpush1.xpose.msra.mxu0 0.0
      %1493 = vmatprep.subr.mxu0 0.0
      %1494 = vmatpush1.xpose.msra.mxu0 0.0
      %1495 = vmatprep.subr.mxu0 0.0
      %1496 = vmatpush1.xpose.msra.mxu0 0.0
      %1497 = vmatprep.subr.mxu0 0.0
      %1498 = vmatpush1.xpose.msra.mxu0 0.0
      %1499 = vmatprep.subr.mxu0 0.0
      %1500 = vmatpush1.xpose.msra.mxu0 0.0
      %1501 = vmatprep.subr.mxu0 0.0
      %1502 = vmatpush1.xpose.msra.mxu0 0.0
      %1503 = vmatprep.subr.mxu0 0.0
      %1504 = vmatpush1.xpose.msra.mxu0 0.0
      %1505 = vmatprep.subr.mxu0 0.0
      %1506 = vmatpush1.xpose.msra.mxu0 0.0
      %1507 = vmatprep.subr.mxu0 0.0
      %1508 = vmatpush1.xpose.msra.mxu0 0.0
      %1509 = vmatprep.subr.mxu0 0.0
      %1510 = vmatpush1.xpose.msra.mxu0 0.0
      %1511 = vmatprep.subr.mxu0 0.0
      %1512 = vmatpush1.xpose.msra.mxu0 0.0
      %1513 = vmatprep.subr.mxu0 0.0
      %1514 = vmatpush1.xpose.msra.mxu0 0.0
      %1515 = vmatprep.subr.mxu0 0.0
      %1516 = vmatpush1.xpose.msra.mxu0 0.0
      %1517 = vmatprep.subr.mxu0 0.0
      %1518 = vmatpush1.xpose.msra.mxu0 0.0
      %1519 = vmatprep.subr.mxu0 0.0
      %1520 = vmatpush1.xpose.msra.mxu0 0.0
      %1521 = vmatprep.subr.mxu0 0.0
      %1522 = vmatpush1.xpose.msra.mxu0 0.0
      %1523 = vmatprep.subr.mxu0 0.0
      %1524 = vmatpush1.xpose.msra.mxu0 0.0
      %1525 = vmatprep.subr.mxu0 0.0
      %1526 = vmatpush1.xpose.msra.mxu0 0.0
      %1527 = vmatprep.subr.mxu0 0.0
      %1528 = vmatpush1.xpose.msra.mxu0 0.0
      %1529 = vmatprep.subr.mxu0 0.0
      %1530 = vmatpush1.xpose.msra.mxu0 0.0
      %1531 = vmatprep.subr.mxu0 0.0
      %1532 = vmatpush1.xpose.msra.mxu0 0.0
      %1533 = vmatprep.subr.mxu0 0.0
      %1534 = vmatpush1.xpose.msra.mxu0 0.0
      %1535 = vmatprep.subr.mxu0 0.0
      %1536 = vmatpush1.xpose.msra.mxu0 0.0
      %1537 = vmatprep.subr.mxu0 0.0
      %1538 = vmatpush1.xpose.msra.mxu0 0.0
      %1539 = vmatprep.subr.mxu0 0.0
      %1540 = vmatpush1.xpose.msra.mxu0 0.0
      %1541 = vmatprep.subr.mxu0 0.0
      %1542 = vmatpush1.xpose.msra.mxu0 0.0
      %1543 = vmatprep.subr.mxu0 0.0
      %1544 = vmatpush1.xpose.msra.mxu0 0.0
      %1545 = vmatprep.subr.mxu0 0.0
      %1546 = vmatpush1.xpose.msra.mxu0 0.0
      %1547 = vmatprep.mubr.f32.mxu0 0.0
      %1548 = vmatmul.mubr.f32.gmra.mrb[0].mxu0 %v1479
      %v1549 = vpop.f32.mrb[0].mxu0
      %v1550 = vadd.f32 %v1474, %v1549
      %v1551 = vpop.f32.mrb[0].mxu0
      %1552 = vdwg.mxu0
      %v1553 = vld [vmem:[%s21] sm:$0xff]
      %v1555 = vcombine.high %v1553, %v1553
      %vm1556 = vcmask 31744
      %v1558 = vsel %vm1556, %v1550, 0
      %vm1560 = vcmask 1043456
      %v1561 = vsel %vm1560, %v1553, 0
      %v1563 = vsel %vm1560, %v1555, 0
      %1565 = vmatprep.subr.mxu0 %v1563
      %1566 = vmatpush1.msra.mxu0 %v1561
      %1567 = vmatprep.subr.mxu0 0.0
      %1568 = vmatpush1.msra.mxu0 0.0
      %1569 = vmatprep.subr.mxu0 0.0
      %1570 = vmatpush1.msra.mxu0 0.0
      %1571 = vmatprep.subr.mxu0 0.0
      %1572 = vmatpush1.msra.mxu0 0.0
      %1573 = vmatprep.subr.mxu0 0.0
      %1574 = vmatpush1.msra.mxu0 0.0
      %1575 = vmatprep.subr.mxu0 0.0
      %1576 = vmatpush1.msra.mxu0 0.0
      %1577 = vmatprep.subr.mxu0 0.0
      %1578 = vmatpush1.msra.mxu0 0.0
      %1579 = vmatprep.subr.mxu0 0.0
      %1580 = vmatpush1.msra.mxu0 0.0
      %1581 = vmatprep.subr.mxu0 0.0
      %1582 = vmatpush1.msra.mxu0 0.0
      %1583 = vmatprep.subr.mxu0 0.0
      %1584 = vmatpush1.msra.mxu0 0.0
      %1585 = vmatprep.subr.mxu0 0.0
      %1586 = vmatpush1.msra.mxu0 0.0
      %1587 = vmatprep.subr.mxu0 0.0
      %1588 = vmatpush1.msra.mxu0 0.0
      %1589 = vmatprep.subr.mxu0 0.0
      %1590 = vmatpush1.msra.mxu0 0.0
      %1591 = vmatprep.subr.mxu0 0.0
      %1592 = vmatpush1.msra.mxu0 0.0
      %1593 = vmatprep.subr.mxu0 0.0
      %1594 = vmatpush1.msra.mxu0 0.0
      %1595 = vmatprep.subr.mxu0 0.0
      %1596 = vmatpush1.msra.mxu0 0.0
      %1597 = vmatprep.subr.mxu0 0.0
      %1598 = vmatpush1.msra.mxu0 0.0
      %1599 = vmatprep.subr.mxu0 0.0
      %1600 = vmatpush1.msra.mxu0 0.0
      %1601 = vmatprep.subr.mxu0 0.0
      %1602 = vmatpush1.msra.mxu0 0.0
      %1603 = vmatprep.subr.mxu0 0.0
      %1604 = vmatpush1.msra.mxu0 0.0
      %1605 = vmatprep.subr.mxu0 0.0
      %1606 = vmatpush1.msra.mxu0 0.0
      %1607 = vmatprep.subr.mxu0 0.0
      %1608 = vmatpush1.msra.mxu0 0.0
      %1609 = vmatprep.subr.mxu0 0.0
      %1610 = vmatpush1.msra.mxu0 0.0
      %1611 = vmatprep.subr.mxu0 0.0
      %1612 = vmatpush1.msra.mxu0 0.0
      %1613 = vmatprep.subr.mxu0 0.0
      %1614 = vmatpush1.msra.mxu0 0.0
      %1615 = vmatprep.subr.mxu0 0.0
      %1616 = vmatpush1.msra.mxu0 0.0
      %1617 = vmatprep.subr.mxu0 0.0
      %1618 = vmatpush1.msra.mxu0 0.0
      %1619 = vmatprep.subr.mxu0 0.0
      %1620 = vmatpush1.msra.mxu0 0.0
      %1621 = vmatprep.subr.mxu0 0.0
      %1622 = vmatpush1.msra.mxu0 0.0
      %1623 = vmatprep.subr.mxu0 0.0
      %1624 = vmatpush1.msra.mxu0 0.0
      %1625 = vmatprep.subr.mxu0 0.0
      %1626 = vmatpush1.msra.mxu0 0.0
      %1627 = vmatprep.subr.mxu0 0.0
      %1628 = vmatpush1.msra.mxu0 0.0
      %1629 = vmatprep.mubr.f32.mxu0 0.0
      %1630 = vmatmul.mubr.f32.gmra.mrb[0].mxu0 %v1558
      %v1631 = vpop.f32.mrb[0].mxu0
      %v1632 = vadd.f32 0.0, %v1631
      %v1633 = vpop.f32.mrb[0].mxu0
      %v1634 = vadd.f32 0.0, %v1633
      %1635 = vdwg.mxu0
      %v1638 = vcombine.low %v1632, %v1634
      %1640 = vst [vmem:[%s683] sm:$0xff] %v1638
      %p1641 = scmp.lt.s32.totalorder %s33, 1
      %s1642 = scalar_select %p1641, %s33, 1
      %s1643 = smul.addr %s1642, 2
      %s1644 = smul.addr %s1643, 4
      %s1645 = scalar_lea.vmem %s22, %s1644
      // Predicated region
      $region109: #{segmenter_forward.1} parent=107 // pred_check
        %p1646 = pneg %p518
      $region110: #{segmenter_forward.1} parent=107 // pred_check_branch
        %1648 = sbr.rel (%p1646) target = $region112
      $region111: #{segmenter_forward.1} parent=107 // pred_region
        _
      $region112: #{segmenter_forward.1} parent=107 // pred_fallthru
        _
    $region108: #{segmenter_forward.1} parent=5 // pred_fallthru
      _
    %p1649 = scmp.le.s32.totalorder 2, %s28
    // Predicated region
    $region113: #{segmenter_forward.1} parent=5 // pred_check
      %p1650 = pneg %p1649
    $region114: #{segmenter_forward.1} parent=5 // pred_check_branch
      %1652 = sbr.rel (%p1650) target = $region116
    $region115: #{segmenter_forward.1} parent=5 // pred_region
      %s1653 = ssub.s32 %s28, 2
      // Predicated region
      $region117: #{segmenter_forward.1} parent=115 // pred_check
        %p1654 = pneg %p524
      $region118: #{segmenter_forward.1} parent=115 // pred_check_branch
        %1656 = sbr.rel (%p1654) target = $region120
      $region119: #{segmenter_forward.1} parent=115 // pred_region
        %p1657 = scmp.lt.s32.totalorder %s34, 1
        %s1658 = scalar_select %p1657, %s34, 1
        %s1659 = smul.addr %s1658, 2
        %s1660 = smul.addr %s1659, 4
        %s1661 = scalar_lea.vmem %s22, %s1660
      $region120: #{segmenter_forward.1} parent=115 // pred_fallthru
        _
    $region116: #{segmenter_forward.1} parent=5 // pred_fallthru
      _
  $region6: #{segmenter_forward.1} parent=0 // loop_footer
    %s32 = sadd.s32 1, %s28
  $region7: #{segmenter_forward.1} parent=0 // loop_footer_branch
    %27 = sbr.rel target = $region3
  $region8: #{segmenter_forward.1} parent=0 // loop_exit
    _

</llo_original>
